<compile_context>
chip_gen: v7x
topology: tpu7x:2x2x1
jax: 0.10.0
libtpu: 0.0.40
codegen_flags: <defaults>
</compile_context>

<pallas_src>
import functools

import jax
import jax.numpy as jnp
from jax import lax
from jax.experimental import pallas as pl
from jax.experimental.pallas import tpu as pltpu


# ----------------------------------------------------------------------------
# Pallas kernel: the whole block forward for one (batch image, output-row tile)
# ----------------------------------------------------------------------------
def _block_kernel(xpp_ref, w1_ref, b1_ref, dwm_ref, b2_ref, w2_ref, b3_ref,
                  dwp_ref, bp1_ref, wp_ref, bp2_ref,
                  oproj_ref, omain_ref, hph_ref,
                  *, K, p, H, W, Wo, THo):
    Cin = xpp_ref.shape[-1]
    Cmid = w1_ref.shape[1]
    Hh, Wh = H // 2, W // 2
    # first interior (un-padded) pixel inside each row/col phase plane
    ri0 = tuple((p - r + 1) // 2 for r in range(2))
    cj0 = tuple((p - c + 1) // 2 for c in range(2))

    t = pl.program_id(1)

    # --- branch_main stage 1: 1x1 conv (+BN) + ReLU, once per image ---------
    # Interior pixels only; result scattered into a zero-initialised,
    # phase-split, spatially padded VMEM scratch that every row tile reuses.
    @pl.when(t == 0)
    def _():
        hph_ref[...] = jnp.zeros_like(hph_ref)
        w1 = w1_ref[...]                                   # (Cin, Cmid) bf16
        b1 = b1_ref[...]                                   # (1, Cmid)   f32
        for r in range(2):
            for c in range(2):
                xin = xpp_ref[0, 2 * r + c,
                              ri0[r]:ri0[r] + Hh,
                              cj0[c]:cj0[c] + Wh, :]       # (Hh, Wh, Cin)
                hin = jnp.dot(xin.reshape(Hh * Wh, Cin).astype(jnp.bfloat16),
                              w1, preferred_element_type=jnp.float32)
                hin = jnp.maximum(hin + b1, 0.0)
                hph_ref[2 * r + c,
                        ri0[r]:ri0[r] + Hh,
                        cj0[c]:cj0[c] + Wh, :] = hin.reshape(Hh, Wh, Cmid)

    # --- stride-2 depthwise KxK (+BN) for both branches ----------------------
    oy0 = pl.multiple_of(t * THo, THo)          # first output row of this tile
    dwm = dwm_ref[...]                          # (K*K, 1, Cmid), hoisted load
    dwp = dwp_ref[...]                          # (K*K, 1, Cin)
    accm = jnp.zeros((THo, Wo, Cmid), jnp.float32)
    accp = jnp.zeros((THo, Wo, Cin), jnp.float32)
    for ky in range(K):
        for kx in range(K):
            ph = 2 * (ky % 2) + (kx % 2)        # phase plane of this tap
            rs = pl.ds(oy0 + ky // 2, THo)      # unit-stride row window
            cs = pl.ds(kx // 2, Wo)             # unit-stride col window
            accm = accm + hph_ref[ph, rs, cs, :] * dwm[ky * K + kx]
            accp = accp + xpp_ref[0, ph, rs, cs, :] * dwp[ky * K + kx]
    accm = accm + b2_ref[...]
    accp = accp + bp1_ref[...]

    # --- final 1x1 convs (+BN) + ReLU ----------------------------------------
    gm = jnp.dot(accm.reshape(THo * Wo, Cmid).astype(jnp.bfloat16),
                 w2_ref[...], preferred_element_type=jnp.float32)
    main = jnp.maximum(gm + b3_ref[...], 0.0)

    gp = jnp.dot(accp.reshape(THo * Wo, Cin).astype(jnp.bfloat16),
                 wp_ref[...], preferred_element_type=jnp.float32)
    proj = jnp.maximum(gp + bp2_ref[...], 0.0)

    # TODO(synk): a lane-dense (W*C-packed) output layout would widen these
    # stores beyond 12 lanes; left out to keep the depthwise indexing simple.
    omain_ref[0] = main.reshape(THo, Wo, omain_ref.shape[-1]).astype(omain_ref.dtype)
    oproj_ref[0] = proj.reshape(THo, Wo, oproj_ref.shape[-1]).astype(oproj_ref.dtype)


# ----------------------------------------------------------------------------
# Wrapper: BN folding, NCHW<->NHWC + phase split, pallas_call
# ----------------------------------------------------------------------------
def _fold_bn(gamma, beta, mean, var, eps=1e-5):
    s = gamma / jnp.sqrt(var + eps)
    return s, beta - mean * s


def _row_tile(ho, cap=64):
    """Largest divisor of `ho` that is <= min(cap, ho // 2)."""
    target = max(1, min(cap, ho // 2 if ho > 1 else 1))
    for cand in range(target, 0, -1):
        if ho % cand == 0:
            return cand
    return ho


def shuffle_v2_block_s2(old_x, params, *, ksize):
    """Forward of ShuffleV2BlockS2 (stride=2).
    old_x: (B, inp, H, W) f32 NCHW -> (B, oup, H//2, W//2) f32 NCHW."""
    B, Cin, H, W = old_x.shape
    K = ksize
    p = K // 2
    assert K % 2 == 1
    assert H % 2 == 0 and W % 2 == 0
    # TODO(synk): odd H/W needs per-phase interior extents; not required here.

    Ho = (H + 2 * p - K) // 2 + 1
    Wo = (W + 2 * p - K) // 2 + 1
    Cmid = params["W1"].shape[0]
    Cmain = params["W2"].shape[0]

    # ---- fold inference-mode BN into conv weights / biases -----------------
    s1, t1 = _fold_bn(params["g1"], params["be1"], params["m1"], params["v1"])
    s2, t2 = _fold_bn(params["g2"], params["be2"], params["m2"], params["v2"])
    s3, t3 = _fold_bn(params["g3"], params["be3"], params["m3"], params["v3"])
    sp1, tp1 = _fold_bn(params["gp1"], params["bep1"], params["mp1"], params["vp1"])
    sp2, tp2 = _fold_bn(params["gp2"], params["bep2"], params["mp2"], params["vp2"])

    # pointwise weights as (Cin, Cout) bf16 MXU operands (f32 accumulation)
    w1 = (params["W1"][:, :, 0, 0].T * s1[None, :]).astype(jnp.bfloat16)
    w2 = (params["W2"][:, :, 0, 0].T * s3[None, :]).astype(jnp.bfloat16)
    wp = (params["Wp_pw"][:, :, 0, 0].T * sp2[None, :]).astype(jnp.bfloat16)
    b1 = t1[None, :].astype(jnp.float32)
    b3 = t3[None, :].astype(jnp.float32)
    bp2 = tp2[None, :].astype(jnp.float32)
    # depthwise weights, pre-shaped once as (K*K, 1, C) (no per-tap reshapes)
    dwm = (jnp.transpose(params["Wdw"][:, 0], (1, 2, 0)) * s2[None, None, :]
           ).reshape(K * K, 1, Cmid).astype(jnp.float32)
    dwp = (jnp.transpose(params["Wp_dw"][:, 0], (1, 2, 0)) * sp1[None, None, :]
           ).reshape(K * K, 1, Cin).astype(jnp.float32)
    b2 = t2[None, :].astype(jnp.float32)
    bp1 = tp1[None, :].astype(jnp.float32)

    # ---- NCHW -> NHWC, zero pad, split into the 4 stride-2 phases ----------
    # xpp[b, 2*r+c, i, j, ch] == padded_x[b, 2*i+r, 2*j+c, ch]; this turns
    # every stride-2 depthwise tap into a unit-stride window inside the kernel.
    Hp, Wp = H + 2 * p, W + 2 * p
    Hpe, Wpe = Hp + (Hp % 2), Wp + (Wp % 2)
    Hq, Wq = Hpe // 2, Wpe // 2
    x = jnp.transpose(old_x, (0, 2, 3, 1)).astype(jnp.float32)
    x = jnp.pad(x, ((0, 0), (p, Hpe - H - p), (p, Wpe - W - p), (0, 0)))
    xpp = jnp.transpose(x.reshape(B, Hq, 2, Wq, 2, Cin),
                        (0, 2, 4, 1, 3, 5)).reshape(B, 4, Hq, Wq, Cin)

    THo = _row_tile(Ho)
    nt = Ho // THo

    kernel = functools.partial(_block_kernel, K=K, p=p, H=H, W=W,
                               Wo=Wo, THo=THo)

    def _wspec(shape):
        return pl.BlockSpec(shape, lambda b, t: (0,) * len(shape))

    flops = 2 * B * (H * W * Cin * Cmid
                     + Ho * Wo * K * K * (Cmid + Cin)
                     + Ho * Wo * (Cmid * Cmain + Cin * Cin))
    bytes_accessed = (4 * xpp.size + 4 * B * Ho * Wo * (Cin + Cmain)
                      + 2 * (w1.size + w2.size + wp.size)
                      + 4 * (dwm.size + dwp.size)
                      + 4 * (b1.size + b2.size + b3.size + bp1.size + bp2.size))

    proj_nhwc, main_nhwc = pl.pallas_call(
        kernel,
        out_shape=(jax.ShapeDtypeStruct((B, Ho, Wo, Cin), jnp.float32),
                   jax.ShapeDtypeStruct((B, Ho, Wo, Cmain), jnp.float32)),
        grid=(B, nt),
        in_specs=[
            pl.BlockSpec((1, 4, Hq, Wq, Cin), lambda b, t: (b, 0, 0, 0, 0)),
            _wspec((Cin, Cmid)), _wspec((1, Cmid)),
            _wspec((K * K, 1, Cmid)), _wspec((1, Cmid)),
            _wspec((Cmid, Cmain)), _wspec((1, Cmain)),
            _wspec((K * K, 1, Cin)), _wspec((1, Cin)),
            _wspec((Cin, Cin)), _wspec((1, Cin)),
        ],
        out_specs=(pl.BlockSpec((1, THo, Wo, Cin), lambda b, t: (b, t, 0, 0)),
                   pl.BlockSpec((1, THo, Wo, Cmain), lambda b, t: (b, t, 0, 0))),
        scratch_shapes=[pltpu.VMEM((4, Hq, Wq, Cmid), jnp.float32)],
        compiler_params=pltpu.CompilerParams(
            dimension_semantics=("parallel", "arbitrary"),
            vmem_limit_bytes=32 * 1024 * 1024),
        cost_estimate=pl.CostEstimate(flops=flops, transcendentals=0,
                                      bytes_accessed=bytes_accessed),
    )(xpp, w1, b1, dwm, b2, w2, b3, dwp, bp1, wp, bp2)

    # torch.cat((branch_proj, branch_main), dim=1), back to NCHW.
    # TODO(synk): in a multi-block NHWC pipeline, fuse this by writing both
    # branches into a shared output slab (channel-offset out_specs / aliasing).
    out = jnp.concatenate((proj_nhwc, main_nhwc), axis=-1)
    return jnp.transpose(out, (0, 3, 1, 2))


# ----------------------------------------------------------------------------
# Pure-JAX reference (unfolded convs + BN) for correctness checking
# ----------------------------------------------------------------------------
def _conv2d(x, w, *, stride=1, padding=0, groups=1):
    return lax.conv_general_dilated(
        x, w, window_strides=(stride, stride),
        padding=[(padding, padding), (padding, padding)],
        dimension_numbers=("NCHW", "OIHW", "NCHW"),
        feature_group_count=groups)


def _bn(x, gamma, beta, mean, var, eps=1e-5):
    s = gamma / jnp.sqrt(var + eps)
    return x * s[None, :, None, None] + (beta - mean * s)[None, :, None, None]


def reference_block(old_x, params, ksize):
    pad = ksize // 2
    mid = params["W1"].shape[0]
    inp = params["Wp_dw"].shape[0]
    # branch_proj: dw KxK stride-2 ConvBN -> 1x1 ConvBNReLU
    xp = _conv2d(old_x, params["Wp_dw"], stride=2, padding=pad, groups=inp)
    xp = _bn(xp, params["gp1"], params["bep1"], params["mp1"], params["vp1"])
    xp = _conv2d(xp, params["Wp_pw"])
    xp = jnp.maximum(_bn(xp, params["gp2"], params["bep2"], params["mp2"],
                         params["vp2"]), 0.0)
    # branch_main: 1x1 ConvBNReLU -> dw KxK stride-2 ConvBN -> 1x1 ConvBNReLU
    h = _conv2d(old_x, params["W1"])
    h = jnp.maximum(_bn(h, params["g1"], params["be1"], params["m1"],
                        params["v1"]), 0.0)
    h = _conv2d(h, params["Wdw"], stride=2, padding=pad, groups=mid)
    h = _bn(h, params["g2"], params["be2"], params["m2"], params["v2"])
    h = _conv2d(h, params["W2"])
    h = jnp.maximum(_bn(h, params["g3"], params["be3"], params["m3"],
                        params["v3"]), 0.0)
    return jnp.concatenate((xp, h), axis=1)


# ----------------------------------------------------------------------------
if __name__ == "__main__":
    # Module config: inp=4, mid_channels=8, oup=12 (outputs = oup - inp = 8),
    # ksize=3, stride=2.  Input (2, 4, 16, 16) -> output (2, 12, 8, 8).
    inp, mid, oup, ksize = 4, 8, 12, 3
    outputs = oup - inp
    B, H, W = 2, 16, 16

    key = jax.random.PRNGKey(0)
    ks = jax.random.split(key, 27)
    old_x = jax.random.normal(ks[0], (B, inp, H, W), jnp.float32)

    def _u(k, shape):
        return jax.random.uniform(k, shape, minval=0.5, maxval=1.5)

    params = {
        # branch_main
        "W1":  jax.random.normal(ks[1], (mid, inp, 1, 1), jnp.float32) * 0.5,
        "g1":  _u(ks[2], (mid,)), "be1": jax.random.normal(ks[3], (mid,)) * 0.1,
        "m1":  jax.random.normal(ks[4], (mid,)) * 0.1, "v1": _u(ks[5], (mid,)),
        "Wdw": jax.random.normal(ks[6], (mid, 1, ksize, ksize), jnp.float32) * 0.5,
        "g2":  _u(ks[7], (mid,)), "be2": jax.random.normal(ks[8], (mid,)) * 0.1,
        "m2":  jax.random.normal(ks[9], (mid,)) * 0.1, "v2": _u(ks[10], (mid,)),
        "W2":  jax.random.normal(ks[11], (outputs, mid, 1, 1), jnp.float32) * 0.5,
        "g3":  _u(ks[12], (outputs,)), "be3": jax.random.normal(ks[13], (outputs,)) * 0.1,
        "m3":  jax.random.normal(ks[14], (outputs,)) * 0.1, "v3": _u(ks[15], (outputs,)),
        # branch_proj
        "Wp_dw": jax.random.normal(ks[16], (inp, 1, ksize, ksize), jnp.float32) * 0.5,
        "gp1": _u(ks[17], (inp,)), "bep1": jax.random.normal(ks[18], (inp,)) * 0.1,
        "mp1": jax.random.normal(ks[19], (inp,)) * 0.1, "vp1": _u(ks[20], (inp,)),
        "Wp_pw": jax.random.normal(ks[21], (inp, inp, 1, 1), jnp.float32) * 0.5,
        "gp2": _u(ks[22], (inp,)), "bep2": jax.random.normal(ks[23], (inp,)) * 0.1,
        "mp2": jax.random.normal(ks[24], (inp,)) * 0.1, "vp2": _u(ks[25], (inp,)),
    }

    fwd = jax.jit(shuffle_v2_block_s2, static_argnames=("ksize",))
    out = jax.block_until_ready(fwd(old_x, params, ksize=ksize))
    ref = jax.block_until_ready(reference_block(old_x, params, ksize))

    assert out.shape == (B, oup, H // 2, W // 2), out.shape
    # bf16 MXU operands (f32 accumulation) -> slightly looser tolerance than a
    # pure-f32 comparison.
    max_err = float(jnp.max(jnp.abs(out - ref)))
    assert jnp.allclose(out, ref, rtol=3e-2, atol=5e-2), max_err

    print("KERNEL_OK")
</pallas_src>

<mosaic_0001>
module attributes {stable_mosaic.version = 11 : i64} {
  func.func @_block_kernel(%arg0: i32, %arg1: i32, %arg2: memref<1x4x9x9x4xf32, #tpu.memory_space<vmem>>, %arg3: memref<4x8xbf16, #tpu.memory_space<vmem>>, %arg4: memref<1x8xf32, #tpu.memory_space<vmem>>, %arg5: memref<9x1x8xf32, #tpu.memory_space<vmem>>, %arg6: memref<1x8xf32, #tpu.memory_space<vmem>>, %arg7: memref<8x8xbf16, #tpu.memory_space<vmem>>, %arg8: memref<1x8xf32, #tpu.memory_space<vmem>>, %arg9: memref<9x1x4xf32, #tpu.memory_space<vmem>>, %arg10: memref<1x4xf32, #tpu.memory_space<vmem>>, %arg11: memref<4x4xbf16, #tpu.memory_space<vmem>>, %arg12: memref<1x4xf32, #tpu.memory_space<vmem>>, %arg13: memref<1x4x8x4xf32, #tpu.memory_space<vmem>>, %arg14: memref<1x4x8x8xf32, #tpu.memory_space<vmem>>, %arg15: memref<4x9x9x8xf32, #tpu.memory_space<vmem>>) attributes {dimension_semantics = [#tpu.dimension_semantics<parallel>, #tpu.dimension_semantics<arbitrary>], iteration_bounds = array<i64: 2, 2>, scalar_prefetch = 0 : i64, scratch_operands = 1 : i64, tpu.core_type = #tpu.core_type<tc>, window_params = [{transform_indices = @transform_0, window_bounds = array<i64: 1, 4, 9, 9, 4>}, {pipeline_mode = #tpu.pipeline_mode<synchronous>, transform_indices = @transform_1, window_bounds = array<i64: 4, 8>}, {pipeline_mode = #tpu.pipeline_mode<synchronous>, transform_indices = @transform_2, window_bounds = array<i64: 1, 8>}, {pipeline_mode = #tpu.pipeline_mode<synchronous>, transform_indices = @transform_3, window_bounds = array<i64: 9, 1, 8>}, {pipeline_mode = #tpu.pipeline_mode<synchronous>, transform_indices = @transform_4, window_bounds = array<i64: 1, 8>}, {pipeline_mode = #tpu.pipeline_mode<synchronous>, transform_indices = @transform_5, window_bounds = array<i64: 8, 8>}, {pipeline_mode = #tpu.pipeline_mode<synchronous>, transform_indices = @transform_6, window_bounds = array<i64: 1, 8>}, {pipeline_mode = #tpu.pipeline_mode<synchronous>, transform_indices = @transform_7, window_bounds = array<i64: 9, 1, 4>}, {pipeline_mode = #tpu.pipeline_mode<synchronous>, transform_indices = @transform_8, window_bounds = array<i64: 1, 4>}, {pipeline_mode = #tpu.pipeline_mode<synchronous>, transform_indices = @transform_9, window_bounds = array<i64: 4, 4>}, {pipeline_mode = #tpu.pipeline_mode<synchronous>, transform_indices = @transform_10, window_bounds = array<i64: 1, 4>}, {transform_indices = @transform_11, window_bounds = array<i64: 1, 4, 8, 4>}, {transform_indices = @transform_12, window_bounds = array<i64: 1, 4, 8, 8>}]} {
    %c0_i32 = arith.constant 0 : i32
    %0 = arith.cmpi eq, %arg1, %c0_i32 : i32
    %1 = arith.extui %0 : i1 to i32
    %c0_i32_0 = arith.constant 0 : i32
    %2 = arith.cmpi ne, %1, %c0_i32_0 : i32
    scf.if %2 {
      %cst_99 = arith.constant 0.000000e+00 : f32
      %214 = vector.broadcast %cst_99 : f32 to vector<4x9x9x8xf32>
      %c0_100 = arith.constant 0 : index
      %c0_101 = arith.constant 0 : index
      %c0_102 = arith.constant 0 : index
      %c0_103 = arith.constant 0 : index
      %215 = vector.load %arg15[%c0_100, %c0_101, %c0_102, %c0_103] : memref<4x9x9x8xf32, #tpu.memory_space<vmem>>, vector<4x9x9x8xf32>
      tpu.vector_store %arg15[%c0_100, %c0_101, %c0_102, %c0_103], %214 {strides = array<i32>} : memref<4x9x9x8xf32, #tpu.memory_space<vmem>>, vector<4x9x9x8xf32>,
      %c0_104 = arith.constant 0 : index
      %c0_105 = arith.constant 0 : index
      %216 = vector.load %arg3[%c0_104, %c0_105] : memref<4x8xbf16, #tpu.memory_space<vmem>>, vector<4x8xbf16>
      %c0_106 = arith.constant 0 : index
      %c0_107 = arith.constant 0 : index
      %217 = vector.load %arg4[%c0_106, %c0_107] : memref<1x8xf32, #tpu.memory_space<vmem>>, vector<1x8xf32>
      %c0_108 = arith.constant 0 : index
      %c0_109 = arith.constant 0 : index
      %c1_110 = arith.constant 1 : index
      %c1_111 = arith.constant 1 : index
      %c0_112 = arith.constant 0 : index
      %218 = vector.load %arg2[%c0_108, %c0_109, %c1_110, %c1_111, %c0_112] : memref<1x4x9x9x4xf32, #tpu.memory_space<vmem>>, vector<1x1x8x8x4xf32>
      %219 = vector.shape_cast %218 : vector<1x1x8x8x4xf32> to vector<8x8x4xf32>
      %220 = vector.shape_cast %219 : vector<8x8x4xf32> to vector<64x4xf32>
      %221 = arith.truncf %220 : vector<64x4xf32> to vector<64x4xbf16>
      %cst_113 = arith.constant dense<0.000000e+00> : vector<64x8xf32>
      %222 = tpu.matmul %221, %216, %cst_113 {dimension_numbers = #tpu.dot_dimension_numbers<[1], [0], [0], [1], [0, 0, 1, 1], [], []>} : vector<64x4xbf16>, vector<4x8xbf16>, vector<64x8xf32> -> vector<64x8xf32>
      %223 = vector.broadcast %217 : vector<1x8xf32> to vector<64x8xf32>
      %224 = arith.addf %222, %223 : vector<64x8xf32>
      %cst_114 = arith.constant 0.000000e+00 : f32
      %225 = vector.broadcast %cst_114 : f32 to vector<64x8xf32>
      %226 = arith.maximumf %224, %225 : vector<64x8xf32>
      %227 = vector.shape_cast %226 : vector<64x8xf32> to vector<8x8x8xf32>
      %c0_115 = arith.constant 0 : index
      %c1_116 = arith.constant 1 : index
      %c1_117 = arith.constant 1 : index
      %c0_118 = arith.constant 0 : index
      %228 = vector.load %arg15[%c0_115, %c1_116, %c1_117, %c0_118] : memref<4x9x9x8xf32, #tpu.memory_space<vmem>>, vector<1x8x8x8xf32>
      %229 = vector.shape_cast %228 : vector<1x8x8x8xf32> to vector<8x8x8xf32>
      %230 = vector.shape_cast %227 : vector<8x8x8xf32> to vector<1x8x8x8xf32>
      tpu.vector_store %arg15[%c0_115, %c1_116, %c1_117, %c0_118], %230 {strides = array<i32>} : memref<4x9x9x8xf32, #tpu.memory_space<vmem>>, vector<1x8x8x8xf32>,
      %c0_119 = arith.constant 0 : index
      %c1_120 = arith.constant 1 : index
      %c1_121 = arith.constant 1 : index
      %c0_122 = arith.constant 0 : index
      %c0_123 = arith.constant 0 : index
      %231 = vector.load %arg2[%c0_119, %c1_120, %c1_121, %c0_122, %c0_123] : memref<1x4x9x9x4xf32, #tpu.memory_space<vmem>>, vector<1x1x8x8x4xf32>
      %232 = vector.shape_cast %231 : vector<1x1x8x8x4xf32> to vector<8x8x4xf32>
      %233 = vector.shape_cast %232 : vector<8x8x4xf32> to vector<64x4xf32>
      %234 = arith.truncf %233 : vector<64x4xf32> to vector<64x4xbf16>
      %cst_124 = arith.constant dense<0.000000e+00> : vector<64x8xf32>
      %235 = tpu.matmul %234, %216, %cst_124 {dimension_numbers = #tpu.dot_dimension_numbers<[1], [0], [0], [1], [0, 0, 1, 1], [], []>} : vector<64x4xbf16>, vector<4x8xbf16>, vector<64x8xf32> -> vector<64x8xf32>
      %236 = vector.broadcast %217 : vector<1x8xf32> to vector<64x8xf32>
      %237 = arith.addf %235, %236 : vector<64x8xf32>
      %cst_125 = arith.constant 0.000000e+00 : f32
      %238 = vector.broadcast %cst_125 : f32 to vector<64x8xf32>
      %239 = arith.maximumf %237, %238 : vector<64x8xf32>
      %240 = vector.shape_cast %239 : vector<64x8xf32> to vector<8x8x8xf32>
      %c1_126 = arith.constant 1 : index
      %c1_127 = arith.constant 1 : index
      %c0_128 = arith.constant 0 : index
      %c0_129 = arith.constant 0 : index
      %241 = vector.load %arg15[%c1_126, %c1_127, %c0_128, %c0_129] : memref<4x9x9x8xf32, #tpu.memory_space<vmem>>, vector<1x8x8x8xf32>
      %242 = vector.shape_cast %241 : vector<1x8x8x8xf32> to vector<8x8x8xf32>
      %243 = vector.shape_cast %240 : vector<8x8x8xf32> to vector<1x8x8x8xf32>
      tpu.vector_store %arg15[%c1_126, %c1_127, %c0_128, %c0_129], %243 {strides = array<i32>} : memref<4x9x9x8xf32, #tpu.memory_space<vmem>>, vector<1x8x8x8xf32>,
      %c0_130 = arith.constant 0 : index
      %c2_131 = arith.constant 2 : index
      %c0_132 = arith.constant 0 : index
      %c1_133 = arith.constant 1 : index
      %c0_134 = arith.constant 0 : index
      %244 = vector.load %arg2[%c0_130, %c2_131, %c0_132, %c1_133, %c0_134] : memref<1x4x9x9x4xf32, #tpu.memory_space<vmem>>, vector<1x1x8x8x4xf32>
      %245 = vector.shape_cast %244 : vector<1x1x8x8x4xf32> to vector<8x8x4xf32>
      %246 = vector.shape_cast %245 : vector<8x8x4xf32> to vector<64x4xf32>
      %247 = arith.truncf %246 : vector<64x4xf32> to vector<64x4xbf16>
      %cst_135 = arith.constant dense<0.000000e+00> : vector<64x8xf32>
      %248 = tpu.matmul %247, %216, %cst_135 {dimension_numbers = #tpu.dot_dimension_numbers<[1], [0], [0], [1], [0, 0, 1, 1], [], []>} : vector<64x4xbf16>, vector<4x8xbf16>, vector<64x8xf32> -> vector<64x8xf32>
      %249 = vector.broadcast %217 : vector<1x8xf32> to vector<64x8xf32>
      %250 = arith.addf %248, %249 : vector<64x8xf32>
      %cst_136 = arith.constant 0.000000e+00 : f32
      %251 = vector.broadcast %cst_136 : f32 to vector<64x8xf32>
      %252 = arith.maximumf %250, %251 : vector<64x8xf32>
      %253 = vector.shape_cast %252 : vector<64x8xf32> to vector<8x8x8xf32>
      %c2_137 = arith.constant 2 : index
      %c0_138 = arith.constant 0 : index
      %c1_139 = arith.constant 1 : index
      %c0_140 = arith.constant 0 : index
      %254 = vector.load %arg15[%c2_137, %c0_138, %c1_139, %c0_140] : memref<4x9x9x8xf32, #tpu.memory_space<vmem>>, vector<1x8x8x8xf32>
      %255 = vector.shape_cast %254 : vector<1x8x8x8xf32> to vector<8x8x8xf32>
      %256 = vector.shape_cast %253 : vector<8x8x8xf32> to vector<1x8x8x8xf32>
      tpu.vector_store %arg15[%c2_137, %c0_138, %c1_139, %c0_140], %256 {strides = array<i32>} : memref<4x9x9x8xf32, #tpu.memory_space<vmem>>, vector<1x8x8x8xf32>,
      %c0_141 = arith.constant 0 : index
      %c3_142 = arith.constant 3 : index
      %c0_143 = arith.constant 0 : index
      %c0_144 = arith.constant 0 : index
      %c0_145 = arith.constant 0 : index
      %257 = vector.load %arg2[%c0_141, %c3_142, %c0_143, %c0_144, %c0_145] : memref<1x4x9x9x4xf32, #tpu.memory_space<vmem>>, vector<1x1x8x8x4xf32>
      %258 = vector.shape_cast %257 : vector<1x1x8x8x4xf32> to vector<8x8x4xf32>
      %259 = vector.shape_cast %258 : vector<8x8x4xf32> to vector<64x4xf32>
      %260 = arith.truncf %259 : vector<64x4xf32> to vector<64x4xbf16>
      %cst_146 = arith.constant dense<0.000000e+00> : vector<64x8xf32>
      %261 = tpu.matmul %260, %216, %cst_146 {dimension_numbers = #tpu.dot_dimension_numbers<[1], [0], [0], [1], [0, 0, 1, 1], [], []>} : vector<64x4xbf16>, vector<4x8xbf16>, vector<64x8xf32> -> vector<64x8xf32>
      %262 = vector.broadcast %217 : vector<1x8xf32> to vector<64x8xf32>
      %263 = arith.addf %261, %262 : vector<64x8xf32>
      %cst_147 = arith.constant 0.000000e+00 : f32
      %264 = vector.broadcast %cst_147 : f32 to vector<64x8xf32>
      %265 = arith.maximumf %263, %264 : vector<64x8xf32>
      %266 = vector.shape_cast %265 : vector<64x8xf32> to vector<8x8x8xf32>
      %c3_148 = arith.constant 3 : index
      %c0_149 = arith.constant 0 : index
      %c0_150 = arith.constant 0 : index
      %c0_151 = arith.constant 0 : index
      %267 = vector.load %arg15[%c3_148, %c0_149, %c0_150, %c0_151] : memref<4x9x9x8xf32, #tpu.memory_space<vmem>>, vector<1x8x8x8xf32>
      %268 = vector.shape_cast %267 : vector<1x8x8x8xf32> to vector<8x8x8xf32>
      %269 = vector.shape_cast %266 : vector<8x8x8xf32> to vector<1x8x8x8xf32>
      tpu.vector_store %arg15[%c3_148, %c0_149, %c0_150, %c0_151], %269 {strides = array<i32>} : memref<4x9x9x8xf32, #tpu.memory_space<vmem>>, vector<1x8x8x8xf32>,
    } else {
    }
    %c4_i32 = arith.constant 4 : i32
    %3 = arith.muli %arg1, %c4_i32 : i32
    %4 = tpu.assume_multiple %3, 4 : i32
    %c0 = arith.constant 0 : index
    %c0_1 = arith.constant 0 : index
    %c0_2 = arith.constant 0 : index
    %5 = vector.load %arg5[%c0, %c0_1, %c0_2] : memref<9x1x8xf32, #tpu.memory_space<vmem>>, vector<9x1x8xf32>
    %c0_3 = arith.constant 0 : index
    %c0_4 = arith.constant 0 : index
    %c0_5 = arith.constant 0 : index
    %6 = vector.load %arg9[%c0_3, %c0_4, %c0_5] : memref<9x1x4xf32, #tpu.memory_space<vmem>>, vector<9x1x4xf32>
    %cst = arith.constant 0.000000e+00 : f32
    %7 = vector.broadcast %cst : f32 to vector<4x8x8xf32>
    %cst_6 = arith.constant 0.000000e+00 : f32
    %8 = vector.broadcast %cst_6 : f32 to vector<4x8x4xf32>
    %c0_i32_7 = arith.constant 0 : i32
    %9 = arith.addi %4, %c0_i32_7 : i32
    %c0_8 = arith.constant 0 : index
    %10 = arith.index_cast %9 : i32 to index
    %c0_9 = arith.constant 0 : index
    %c0_10 = arith.constant 0 : index
    %11 = vector.load %arg15[%c0_8, %10, %c0_9, %c0_10] : memref<4x9x9x8xf32, #tpu.memory_space<vmem>>, vector<1x4x8x8xf32>
    %12 = vector.shape_cast %11 : vector<1x4x8x8xf32> to vector<4x8x8xf32>
    %13 = vector.extract_strided_slice %5 {offsets = [0, 0, 0], sizes = [1, 1, 8], strides = [1, 1, 1]} : vector<9x1x8xf32> to vector<1x1x8xf32>
    %14 = vector.shape_cast %13 : vector<1x1x8xf32> to vector<1x8xf32>
    %15 = vector.shape_cast %14 : vector<1x8xf32> to vector<1x1x8xf32>
    %16 = vector.broadcast %15 : vector<1x1x8xf32> to vector<4x8x8xf32>
    %17 = arith.mulf %12, %16 : vector<4x8x8xf32>
    %18 = arith.addf %7, %17 : vector<4x8x8xf32>
    %c0_11 = arith.constant 0 : index
    %c0_12 = arith.constant 0 : index
    %19 = arith.index_cast %9 : i32 to index
    %c0_13 = arith.constant 0 : index
    %c0_14 = arith.constant 0 : index
    %20 = vector.load %arg2[%c0_11, %c0_12, %19, %c0_13, %c0_14] : memref<1x4x9x9x4xf32, #tpu.memory_space<vmem>>, vector<1x1x4x8x4xf32>
    %21 = vector.shape_cast %20 : vector<1x1x4x8x4xf32> to vector<4x8x4xf32>
    %22 = vector.extract_strided_slice %6 {offsets = [0, 0, 0], sizes = [1, 1, 4], strides = [1, 1, 1]} : vector<9x1x4xf32> to vector<1x1x4xf32>
    %23 = vector.shape_cast %22 : vector<1x1x4xf32> to vector<1x4xf32>
    %24 = vector.shape_cast %23 : vector<1x4xf32> to vector<1x1x4xf32>
    %25 = vector.broadcast %24 : vector<1x1x4xf32> to vector<4x8x4xf32>
    %26 = arith.mulf %21, %25 : vector<4x8x4xf32>
    %27 = arith.addf %8, %26 : vector<4x8x4xf32>
    %c0_i32_15 = arith.constant 0 : i32
    %28 = arith.addi %4, %c0_i32_15 : i32
    %c1 = arith.constant 1 : index
    %29 = arith.index_cast %28 : i32 to index
    %c0_16 = arith.constant 0 : index
    %c0_17 = arith.constant 0 : index
    %30 = vector.load %arg15[%c1, %29, %c0_16, %c0_17] : memref<4x9x9x8xf32, #tpu.memory_space<vmem>>, vector<1x4x8x8xf32>
    %31 = vector.shape_cast %30 : vector<1x4x8x8xf32> to vector<4x8x8xf32>
    %32 = vector.extract_strided_slice %5 {offsets = [1, 0, 0], sizes = [1, 1, 8], strides = [1, 1, 1]} : vector<9x1x8xf32> to vector<1x1x8xf32>
    %33 = vector.shape_cast %32 : vector<1x1x8xf32> to vector<1x8xf32>
    %34 = vector.shape_cast %33 : vector<1x8xf32> to vector<1x1x8xf32>
    %35 = vector.broadcast %34 : vector<1x1x8xf32> to vector<4x8x8xf32>
    %36 = arith.mulf %31, %35 : vector<4x8x8xf32>
    %37 = arith.addf %18, %36 : vector<4x8x8xf32>
    %c0_18 = arith.constant 0 : index
    %c1_19 = arith.constant 1 : index
    %38 = arith.index_cast %28 : i32 to index
    %c0_20 = arith.constant 0 : index
    %c0_21 = arith.constant 0 : index
    %39 = vector.load %arg2[%c0_18, %c1_19, %38, %c0_20, %c0_21] : memref<1x4x9x9x4xf32, #tpu.memory_space<vmem>>, vector<1x1x4x8x4xf32>
    %40 = vector.shape_cast %39 : vector<1x1x4x8x4xf32> to vector<4x8x4xf32>
    %41 = vector.extract_strided_slice %6 {offsets = [1, 0, 0], sizes = [1, 1, 4], strides = [1, 1, 1]} : vector<9x1x4xf32> to vector<1x1x4xf32>
    %42 = vector.shape_cast %41 : vector<1x1x4xf32> to vector<1x4xf32>
    %43 = vector.shape_cast %42 : vector<1x4xf32> to vector<1x1x4xf32>
    %44 = vector.broadcast %43 : vector<1x1x4xf32> to vector<4x8x4xf32>
    %45 = arith.mulf %40, %44 : vector<4x8x4xf32>
    %46 = arith.addf %27, %45 : vector<4x8x4xf32>
    %c0_i32_22 = arith.constant 0 : i32
    %47 = arith.addi %4, %c0_i32_22 : i32
    %c0_23 = arith.constant 0 : index
    %48 = arith.index_cast %47 : i32 to index
    %c1_24 = arith.constant 1 : index
    %c0_25 = arith.constant 0 : index
    %49 = vector.load %arg15[%c0_23, %48, %c1_24, %c0_25] : memref<4x9x9x8xf32, #tpu.memory_space<vmem>>, vector<1x4x8x8xf32>
    %50 = vector.shape_cast %49 : vector<1x4x8x8xf32> to vector<4x8x8xf32>
    %51 = vector.extract_strided_slice %5 {offsets = [2, 0, 0], sizes = [1, 1, 8], strides = [1, 1, 1]} : vector<9x1x8xf32> to vector<1x1x8xf32>
    %52 = vector.shape_cast %51 : vector<1x1x8xf32> to vector<1x8xf32>
    %53 = vector.shape_cast %52 : vector<1x8xf32> to vector<1x1x8xf32>
    %54 = vector.broadcast %53 : vector<1x1x8xf32> to vector<4x8x8xf32>
    %55 = arith.mulf %50, %54 : vector<4x8x8xf32>
    %56 = arith.addf %37, %55 : vector<4x8x8xf32>
    %c0_26 = arith.constant 0 : index
    %c0_27 = arith.constant 0 : index
    %57 = arith.index_cast %47 : i32 to index
    %c1_28 = arith.constant 1 : index
    %c0_29 = arith.constant 0 : index
    %58 = vector.load %arg2[%c0_26, %c0_27, %57, %c1_28, %c0_29] : memref<1x4x9x9x4xf32, #tpu.memory_space<vmem>>, vector<1x1x4x8x4xf32>
    %59 = vector.shape_cast %58 : vector<1x1x4x8x4xf32> to vector<4x8x4xf32>
    %60 = vector.extract_strided_slice %6 {offsets = [2, 0, 0], sizes = [1, 1, 4], strides = [1, 1, 1]} : vector<9x1x4xf32> to vector<1x1x4xf32>
    %61 = vector.shape_cast %60 : vector<1x1x4xf32> to vector<1x4xf32>
    %62 = vector.shape_cast %61 : vector<1x4xf32> to vector<1x1x4xf32>
    %63 = vector.broadcast %62 : vector<1x1x4xf32> to vector<4x8x4xf32>
    %64 = arith.mulf %59, %63 : vector<4x8x4xf32>
    %65 = arith.addf %46, %64 : vector<4x8x4xf32>
    %c0_i32_30 = arith.constant 0 : i32
    %66 = arith.addi %4, %c0_i32_30 : i32
    %c2 = arith.constant 2 : index
    %67 = arith.index_cast %66 : i32 to index
    %c0_31 = arith.constant 0 : index
    %c0_32 = arith.constant 0 : index
    %68 = vector.load %arg15[%c2, %67, %c0_31, %c0_32] : memref<4x9x9x8xf32, #tpu.memory_space<vmem>>, vector<1x4x8x8xf32>
    %69 = vector.shape_cast %68 : vector<1x4x8x8xf32> to vector<4x8x8xf32>
    %70 = vector.extract_strided_slice %5 {offsets = [3, 0, 0], sizes = [1, 1, 8], strides = [1, 1, 1]} : vector<9x1x8xf32> to vector<1x1x8xf32>
    %71 = vector.shape_cast %70 : vector<1x1x8xf32> to vector<1x8xf32>
    %72 = vector.shape_cast %71 : vector<1x8xf32> to vector<1x1x8xf32>
    %73 = vector.broadcast %72 : vector<1x1x8xf32> to vector<4x8x8xf32>
    %74 = arith.mulf %69, %73 : vector<4x8x8xf32>
    %75 = arith.addf %56, %74 : vector<4x8x8xf32>
    %c0_33 = arith.constant 0 : index
    %c2_34 = arith.constant 2 : index
    %76 = arith.index_cast %66 : i32 to index
    %c0_35 = arith.constant 0 : index
    %c0_36 = arith.constant 0 : index
    %77 = vector.load %arg2[%c0_33, %c2_34, %76, %c0_35, %c0_36] : memref<1x4x9x9x4xf32, #tpu.memory_space<vmem>>, vector<1x1x4x8x4xf32>
    %78 = vector.shape_cast %77 : vector<1x1x4x8x4xf32> to vector<4x8x4xf32>
    %79 = vector.extract_strided_slice %6 {offsets = [3, 0, 0], sizes = [1, 1, 4], strides = [1, 1, 1]} : vector<9x1x4xf32> to vector<1x1x4xf32>
    %80 = vector.shape_cast %79 : vector<1x1x4xf32> to vector<1x4xf32>
    %81 = vector.shape_cast %80 : vector<1x4xf32> to vector<1x1x4xf32>
    %82 = vector.broadcast %81 : vector<1x1x4xf32> to vector<4x8x4xf32>
    %83 = arith.mulf %78, %82 : vector<4x8x4xf32>
    %84 = arith.addf %65, %83 : vector<4x8x4xf32>
    %c0_i32_37 = arith.constant 0 : i32
    %85 = arith.addi %4, %c0_i32_37 : i32
    %c3 = arith.constant 3 : index
    %86 = arith.index_cast %85 : i32 to index
    %c0_38 = arith.constant 0 : index
    %c0_39 = arith.constant 0 : index
    %87 = vector.load %arg15[%c3, %86, %c0_38, %c0_39] : memref<4x9x9x8xf32, #tpu.memory_space<vmem>>, vector<1x4x8x8xf32>
    %88 = vector.shape_cast %87 : vector<1x4x8x8xf32> to vector<4x8x8xf32>
    %89 = vector.extract_strided_slice %5 {offsets = [4, 0, 0], sizes = [1, 1, 8], strides = [1, 1, 1]} : vector<9x1x8xf32> to vector<1x1x8xf32>
    %90 = vector.shape_cast %89 : vector<1x1x8xf32> to vector<1x8xf32>
    %91 = vector.shape_cast %90 : vector<1x8xf32> to vector<1x1x8xf32>
    %92 = vector.broadcast %91 : vector<1x1x8xf32> to vector<4x8x8xf32>
    %93 = arith.mulf %88, %92 : vector<4x8x8xf32>
    %94 = arith.addf %75, %93 : vector<4x8x8xf32>
    %c0_40 = arith.constant 0 : index
    %c3_41 = arith.constant 3 : index
    %95 = arith.index_cast %85 : i32 to index
    %c0_42 = arith.constant 0 : index
    %c0_43 = arith.constant 0 : index
    %96 = vector.load %arg2[%c0_40, %c3_41, %95, %c0_42, %c0_43] : memref<1x4x9x9x4xf32, #tpu.memory_space<vmem>>, vector<1x1x4x8x4xf32>
    %97 = vector.shape_cast %96 : vector<1x1x4x8x4xf32> to vector<4x8x4xf32>
    %98 = vector.extract_strided_slice %6 {offsets = [4, 0, 0], sizes = [1, 1, 4], strides = [1, 1, 1]} : vector<9x1x4xf32> to vector<1x1x4xf32>
    %99 = vector.shape_cast %98 : vector<1x1x4xf32> to vector<1x4xf32>
    %100 = vector.shape_cast %99 : vector<1x4xf32> to vector<1x1x4xf32>
    %101 = vector.broadcast %100 : vector<1x1x4xf32> to vector<4x8x4xf32>
    %102 = arith.mulf %97, %101 : vector<4x8x4xf32>
    %103 = arith.addf %84, %102 : vector<4x8x4xf32>
    %c0_i32_44 = arith.constant 0 : i32
    %104 = arith.addi %4, %c0_i32_44 : i32
    %c2_45 = arith.constant 2 : index
    %105 = arith.index_cast %104 : i32 to index
    %c1_46 = arith.constant 1 : index
    %c0_47 = arith.constant 0 : index
    %106 = vector.load %arg15[%c2_45, %105, %c1_46, %c0_47] : memref<4x9x9x8xf32, #tpu.memory_space<vmem>>, vector<1x4x8x8xf32>
    %107 = vector.shape_cast %106 : vector<1x4x8x8xf32> to vector<4x8x8xf32>
    %108 = vector.extract_strided_slice %5 {offsets = [5, 0, 0], sizes = [1, 1, 8], strides = [1, 1, 1]} : vector<9x1x8xf32> to vector<1x1x8xf32>
    %109 = vector.shape_cast %108 : vector<1x1x8xf32> to vector<1x8xf32>
    %110 = vector.shape_cast %109 : vector<1x8xf32> to vector<1x1x8xf32>
    %111 = vector.broadcast %110 : vector<1x1x8xf32> to vector<4x8x8xf32>
    %112 = arith.mulf %107, %111 : vector<4x8x8xf32>
    %113 = arith.addf %94, %112 : vector<4x8x8xf32>
    %c0_48 = arith.constant 0 : index
    %c2_49 = arith.constant 2 : index
    %114 = arith.index_cast %104 : i32 to index
    %c1_50 = arith.constant 1 : index
    %c0_51 = arith.constant 0 : index
    %115 = vector.load %arg2[%c0_48, %c2_49, %114, %c1_50, %c0_51] : memref<1x4x9x9x4xf32, #tpu.memory_space<vmem>>, vector<1x1x4x8x4xf32>
    %116 = vector.shape_cast %115 : vector<1x1x4x8x4xf32> to vector<4x8x4xf32>
    %117 = vector.extract_strided_slice %6 {offsets = [5, 0, 0], sizes = [1, 1, 4], strides = [1, 1, 1]} : vector<9x1x4xf32> to vector<1x1x4xf32>
    %118 = vector.shape_cast %117 : vector<1x1x4xf32> to vector<1x4xf32>
    %119 = vector.shape_cast %118 : vector<1x4xf32> to vector<1x1x4xf32>
    %120 = vector.broadcast %119 : vector<1x1x4xf32> to vector<4x8x4xf32>
    %121 = arith.mulf %116, %120 : vector<4x8x4xf32>
    %122 = arith.addf %103, %121 : vector<4x8x4xf32>
    %c1_i32 = arith.constant 1 : i32
    %123 = arith.addi %4, %c1_i32 : i32
    %c0_52 = arith.constant 0 : index
    %124 = arith.index_cast %123 : i32 to index
    %c0_53 = arith.constant 0 : index
    %c0_54 = arith.constant 0 : index
    %125 = vector.load %arg15[%c0_52, %124, %c0_53, %c0_54] : memref<4x9x9x8xf32, #tpu.memory_space<vmem>>, vector<1x4x8x8xf32>
    %126 = vector.shape_cast %125 : vector<1x4x8x8xf32> to vector<4x8x8xf32>
    %127 = vector.extract_strided_slice %5 {offsets = [6, 0, 0], sizes = [1, 1, 8], strides = [1, 1, 1]} : vector<9x1x8xf32> to vector<1x1x8xf32>
    %128 = vector.shape_cast %127 : vector<1x1x8xf32> to vector<1x8xf32>
    %129 = vector.shape_cast %128 : vector<1x8xf32> to vector<1x1x8xf32>
    %130 = vector.broadcast %129 : vector<1x1x8xf32> to vector<4x8x8xf32>
    %131 = arith.mulf %126, %130 : vector<4x8x8xf32>
    %132 = arith.addf %113, %131 : vector<4x8x8xf32>
    %c0_55 = arith.constant 0 : index
    %c0_56 = arith.constant 0 : index
    %133 = arith.index_cast %123 : i32 to index
    %c0_57 = arith.constant 0 : index
    %c0_58 = arith.constant 0 : index
    %134 = vector.load %arg2[%c0_55, %c0_56, %133, %c0_57, %c0_58] : memref<1x4x9x9x4xf32, #tpu.memory_space<vmem>>, vector<1x1x4x8x4xf32>
    %135 = vector.shape_cast %134 : vector<1x1x4x8x4xf32> to vector<4x8x4xf32>
    %136 = vector.extract_strided_slice %6 {offsets = [6, 0, 0], sizes = [1, 1, 4], strides = [1, 1, 1]} : vector<9x1x4xf32> to vector<1x1x4xf32>
    %137 = vector.shape_cast %136 : vector<1x1x4xf32> to vector<1x4xf32>
    %138 = vector.shape_cast %137 : vector<1x4xf32> to vector<1x1x4xf32>
    %139 = vector.broadcast %138 : vector<1x1x4xf32> to vector<4x8x4xf32>
    %140 = arith.mulf %135, %139 : vector<4x8x4xf32>
    %141 = arith.addf %122, %140 : vector<4x8x4xf32>
    %c1_i32_59 = arith.constant 1 : i32
    %142 = arith.addi %4, %c1_i32_59 : i32
    %c1_60 = arith.constant 1 : index
    %143 = arith.index_cast %142 : i32 to index
    %c0_61 = arith.constant 0 : index
    %c0_62 = arith.constant 0 : index
    %144 = vector.load %arg15[%c1_60, %143, %c0_61, %c0_62] : memref<4x9x9x8xf32, #tpu.memory_space<vmem>>, vector<1x4x8x8xf32>
    %145 = vector.shape_cast %144 : vector<1x4x8x8xf32> to vector<4x8x8xf32>
    %146 = vector.extract_strided_slice %5 {offsets = [7, 0, 0], sizes = [1, 1, 8], strides = [1, 1, 1]} : vector<9x1x8xf32> to vector<1x1x8xf32>
    %147 = vector.shape_cast %146 : vector<1x1x8xf32> to vector<1x8xf32>
    %148 = vector.shape_cast %147 : vector<1x8xf32> to vector<1x1x8xf32>
    %149 = vector.broadcast %148 : vector<1x1x8xf32> to vector<4x8x8xf32>
    %150 = arith.mulf %145, %149 : vector<4x8x8xf32>
    %151 = arith.addf %132, %150 : vector<4x8x8xf32>
    %c0_63 = arith.constant 0 : index
    %c1_64 = arith.constant 1 : index
    %152 = arith.index_cast %142 : i32 to index
    %c0_65 = arith.constant 0 : index
    %c0_66 = arith.constant 0 : index
    %153 = vector.load %arg2[%c0_63, %c1_64, %152, %c0_65, %c0_66] : memref<1x4x9x9x4xf32, #tpu.memory_space<vmem>>, vector<1x1x4x8x4xf32>
    %154 = vector.shape_cast %153 : vector<1x1x4x8x4xf32> to vector<4x8x4xf32>
    %155 = vector.extract_strided_slice %6 {offsets = [7, 0, 0], sizes = [1, 1, 4], strides = [1, 1, 1]} : vector<9x1x4xf32> to vector<1x1x4xf32>
    %156 = vector.shape_cast %155 : vector<1x1x4xf32> to vector<1x4xf32>
    %157 = vector.shape_cast %156 : vector<1x4xf32> to vector<1x1x4xf32>
    %158 = vector.broadcast %157 : vector<1x1x4xf32> to vector<4x8x4xf32>
    %159 = arith.mulf %154, %158 : vector<4x8x4xf32>
    %160 = arith.addf %141, %159 : vector<4x8x4xf32>
    %c1_i32_67 = arith.constant 1 : i32
    %161 = arith.addi %4, %c1_i32_67 : i32
    %c0_68 = arith.constant 0 : index
    %162 = arith.index_cast %161 : i32 to index
    %c1_69 = arith.constant 1 : index
    %c0_70 = arith.constant 0 : index
    %163 = vector.load %arg15[%c0_68, %162, %c1_69, %c0_70] : memref<4x9x9x8xf32, #tpu.memory_space<vmem>>, vector<1x4x8x8xf32>
    %164 = vector.shape_cast %163 : vector<1x4x8x8xf32> to vector<4x8x8xf32>
    %165 = vector.extract_strided_slice %5 {offsets = [8, 0, 0], sizes = [1, 1, 8], strides = [1, 1, 1]} : vector<9x1x8xf32> to vector<1x1x8xf32>
    %166 = vector.shape_cast %165 : vector<1x1x8xf32> to vector<1x8xf32>
    %167 = vector.shape_cast %166 : vector<1x8xf32> to vector<1x1x8xf32>
    %168 = vector.broadcast %167 : vector<1x1x8xf32> to vector<4x8x8xf32>
    %169 = arith.mulf %164, %168 : vector<4x8x8xf32>
    %170 = arith.addf %151, %169 : vector<4x8x8xf32>
    %c0_71 = arith.constant 0 : index
    %c0_72 = arith.constant 0 : index
    %171 = arith.index_cast %161 : i32 to index
    %c1_73 = arith.constant 1 : index
    %c0_74 = arith.constant 0 : index
    %172 = vector.load %arg2[%c0_71, %c0_72, %171, %c1_73, %c0_74] : memref<1x4x9x9x4xf32, #tpu.memory_space<vmem>>, vector<1x1x4x8x4xf32>
    %173 = vector.shape_cast %172 : vector<1x1x4x8x4xf32> to vector<4x8x4xf32>
    %174 = vector.extract_strided_slice %6 {offsets = [8, 0, 0], sizes = [1, 1, 4], strides = [1, 1, 1]} : vector<9x1x4xf32> to vector<1x1x4xf32>
    %175 = vector.shape_cast %174 : vector<1x1x4xf32> to vector<1x4xf32>
    %176 = vector.shape_cast %175 : vector<1x4xf32> to vector<1x1x4xf32>
    %177 = vector.broadcast %176 : vector<1x1x4xf32> to vector<4x8x4xf32>
    %178 = arith.mulf %173, %177 : vector<4x8x4xf32>
    %179 = arith.addf %160, %178 : vector<4x8x4xf32>
    %c0_75 = arith.constant 0 : index
    %c0_76 = arith.constant 0 : index
    %180 = vector.load %arg6[%c0_75, %c0_76] : memref<1x8xf32, #tpu.memory_space<vmem>>, vector<1x8xf32>
    %181 = vector.shape_cast %180 : vector<1x8xf32> to vector<1x1x8xf32>
    %182 = vector.broadcast %181 : vector<1x1x8xf32> to vector<4x8x8xf32>
    %183 = arith.addf %170, %182 : vector<4x8x8xf32>
    %c0_77 = arith.constant 0 : index
    %c0_78 = arith.constant 0 : index
    %184 = vector.load %arg10[%c0_77, %c0_78] : memref<1x4xf32, #tpu.memory_space<vmem>>, vector<1x4xf32>
    %185 = vector.shape_cast %184 : vector<1x4xf32> to vector<1x1x4xf32>
    %186 = vector.broadcast %185 : vector<1x1x4xf32> to vector<4x8x4xf32>
    %187 = arith.addf %179, %186 : vector<4x8x4xf32>
    %188 = vector.shape_cast %183 : vector<4x8x8xf32> to vector<32x8xf32>
    %189 = arith.truncf %188 : vector<32x8xf32> to vector<32x8xbf16>
    %c0_79 = arith.constant 0 : index
    %c0_80 = arith.constant 0 : index
    %190 = vector.load %arg7[%c0_79, %c0_80] : memref<8x8xbf16, #tpu.memory_space<vmem>>, vector<8x8xbf16>
    %cst_81 = arith.constant dense<0.000000e+00> : vector<32x8xf32>
    %191 = tpu.matmul %189, %190, %cst_81 {dimension_numbers = #tpu.dot_dimension_numbers<[1], [0], [0], [1], [0, 0, 1, 1], [], []>} : vector<32x8xbf16>, vector<8x8xbf16>, vector<32x8xf32> -> vector<32x8xf32>
    %c0_82 = arith.constant 0 : index
    %c0_83 = arith.constant 0 : index
    %192 = vector.load %arg8[%c0_82, %c0_83] : memref<1x8xf32, #tpu.memory_space<vmem>>, vector<1x8xf32>
    %193 = vector.broadcast %192 : vector<1x8xf32> to vector<32x8xf32>
    %194 = arith.addf %191, %193 : vector<32x8xf32>
    %cst_84 = arith.constant 0.000000e+00 : f32
    %195 = vector.broadcast %cst_84 : f32 to vector<32x8xf32>
    %196 = arith.maximumf %194, %195 : vector<32x8xf32>
    %197 = vector.shape_cast %187 : vector<4x8x4xf32> to vector<32x4xf32>
    %198 = arith.truncf %197 : vector<32x4xf32> to vector<32x4xbf16>
    %c0_85 = arith.constant 0 : index
    %c0_86 = arith.constant 0 : index
    %199 = vector.load %arg11[%c0_85, %c0_86] : memref<4x4xbf16, #tpu.memory_space<vmem>>, vector<4x4xbf16>
    %cst_87 = arith.constant dense<0.000000e+00> : vector<32x4xf32>
    %200 = tpu.matmul %198, %199, %cst_87 {dimension_numbers = #tpu.dot_dimension_numbers<[1], [0], [0], [1], [0, 0, 1, 1], [], []>} : vector<32x4xbf16>, vector<4x4xbf16>, vector<32x4xf32> -> vector<32x4xf32>
    %c0_88 = arith.constant 0 : index
    %c0_89 = arith.constant 0 : index
    %201 = vector.load %arg12[%c0_88, %c0_89] : memref<1x4xf32, #tpu.memory_space<vmem>>, vector<1x4xf32>
    %202 = vector.broadcast %201 : vector<1x4xf32> to vector<32x4xf32>
    %203 = arith.addf %200, %202 : vector<32x4xf32>
    %cst_90 = arith.constant 0.000000e+00 : f32
    %204 = vector.broadcast %cst_90 : f32 to vector<32x4xf32>
    %205 = arith.maximumf %203, %204 : vector<32x4xf32>
    %206 = vector.shape_cast %196 : vector<32x8xf32> to vector<4x8x8xf32>
    %c0_91 = arith.constant 0 : index
    %c0_92 = arith.constant 0 : index
    %c0_93 = arith.constant 0 : index
    %c0_94 = arith.constant 0 : index
    %207 = vector.load %arg14[%c0_91, %c0_92, %c0_93, %c0_94] : memref<1x4x8x8xf32, #tpu.memory_space<vmem>>, vector<1x4x8x8xf32>
    %208 = vector.shape_cast %207 : vector<1x4x8x8xf32> to vector<4x8x8xf32>
    %209 = vector.shape_cast %206 : vector<4x8x8xf32> to vector<1x4x8x8xf32>
    tpu.vector_store %arg14[%c0_91, %c0_92, %c0_93, %c0_94], %209 {strides = array<i32>} : memref<1x4x8x8xf32, #tpu.memory_space<vmem>>, vector<1x4x8x8xf32>,
    %210 = vector.shape_cast %205 : vector<32x4xf32> to vector<4x8x4xf32>
    %c0_95 = arith.constant 0 : index
    %c0_96 = arith.constant 0 : index
    %c0_97 = arith.constant 0 : index
    %c0_98 = arith.constant 0 : index
    %211 = vector.load %arg13[%c0_95, %c0_96, %c0_97, %c0_98] : memref<1x4x8x4xf32, #tpu.memory_space<vmem>>, vector<1x4x8x4xf32>
    %212 = vector.shape_cast %211 : vector<1x4x8x4xf32> to vector<4x8x4xf32>
    %213 = vector.shape_cast %210 : vector<4x8x4xf32> to vector<1x4x8x4xf32>
    tpu.vector_store %arg13[%c0_95, %c0_96, %c0_97, %c0_98], %213 {strides = array<i32>} : memref<1x4x8x4xf32, #tpu.memory_space<vmem>>, vector<1x4x8x4xf32>,
    return
  }
  func.func @transform_0(%arg0: i32, %arg1: i32) -> (i32, i32, i32, i32, i32) {
    %c0_i32 = arith.constant 0 : i32
    %c0_i32_0 = arith.constant 0 : i32
    %c0_i32_1 = arith.constant 0 : i32
    %c0_i32_2 = arith.constant 0 : i32
    %c0_i32_3 = arith.constant 0 : i32
    return %arg0, %c0_i32, %c0_i32_0, %c0_i32_1, %c0_i32_2 : i32, i32, i32, i32, i32
  }
  func.func @transform_1(%arg0: i32, %arg1: i32) -> (i32, i32) {
    %c0_i32 = arith.constant 0 : i32
    %c0_i32_0 = arith.constant 0 : i32
    %c0_i32_1 = arith.constant 0 : i32
    return %c0_i32, %c0_i32_0 : i32, i32
  }
  func.func @transform_2(%arg0: i32, %arg1: i32) -> (i32, i32) {
    %c0_i32 = arith.constant 0 : i32
    %c0_i32_0 = arith.constant 0 : i32
    %c0_i32_1 = arith.constant 0 : i32
    return %c0_i32, %c0_i32_0 : i32, i32
  }
  func.func @transform_3(%arg0: i32, %arg1: i32) -> (i32, i32, i32) {
    %c0_i32 = arith.constant 0 : i32
    %c0_i32_0 = arith.constant 0 : i32
    %c0_i32_1 = arith.constant 0 : i32
    %c0_i32_2 = arith.constant 0 : i32
    return %c0_i32, %c0_i32_0, %c0_i32_1 : i32, i32, i32
  }
  func.func @transform_4(%arg0: i32, %arg1: i32) -> (i32, i32) {
    %c0_i32 = arith.constant 0 : i32
    %c0_i32_0 = arith.constant 0 : i32
    %c0_i32_1 = arith.constant 0 : i32
    return %c0_i32, %c0_i32_0 : i32, i32
  }
  func.func @transform_5(%arg0: i32, %arg1: i32) -> (i32, i32) {
    %c0_i32 = arith.constant 0 : i32
    %c0_i32_0 = arith.constant 0 : i32
    %c0_i32_1 = arith.constant 0 : i32
    return %c0_i32, %c0_i32_0 : i32, i32
  }
  func.func @transform_6(%arg0: i32, %arg1: i32) -> (i32, i32) {
    %c0_i32 = arith.constant 0 : i32
    %c0_i32_0 = arith.constant 0 : i32
    %c0_i32_1 = arith.constant 0 : i32
    return %c0_i32, %c0_i32_0 : i32, i32
  }
  func.func @transform_7(%arg0: i32, %arg1: i32) -> (i32, i32, i32) {
    %c0_i32 = arith.constant 0 : i32
    %c0_i32_0 = arith.constant 0 : i32
    %c0_i32_1 = arith.constant 0 : i32
    %c0_i32_2 = arith.constant 0 : i32
    return %c0_i32, %c0_i32_0, %c0_i32_1 : i32, i32, i32
  }
  func.func @transform_8(%arg0: i32, %arg1: i32) -> (i32, i32) {
    %c0_i32 = arith.constant 0 : i32
    %c0_i32_0 = arith.constant 0 : i32
    %c0_i32_1 = arith.constant 0 : i32
    return %c0_i32, %c0_i32_0 : i32, i32
  }
  func.func @transform_9(%arg0: i32, %arg1: i32) -> (i32, i32) {
    %c0_i32 = arith.constant 0 : i32
    %c0_i32_0 = arith.constant 0 : i32
    %c0_i32_1 = arith.constant 0 : i32
    return %c0_i32, %c0_i32_0 : i32, i32
  }
  func.func @transform_10(%arg0: i32, %arg1: i32) -> (i32, i32) {
    %c0_i32 = arith.constant 0 : i32
    %c0_i32_0 = arith.constant 0 : i32
    %c0_i32_1 = arith.constant 0 : i32
    return %c0_i32, %c0_i32_0 : i32, i32
  }
  func.func @transform_11(%arg0: i32, %arg1: i32) -> (i32, i32, i32, i32) {
    %c0_i32 = arith.constant 0 : i32
    %c0_i32_0 = arith.constant 0 : i32
    %c0_i32_1 = arith.constant 0 : i32
    return %arg0, %arg1, %c0_i32, %c0_i32_0 : i32, i32, i32, i32
  }
  func.func @transform_12(%arg0: i32, %arg1: i32) -> (i32, i32, i32, i32) {
    %c0_i32 = arith.constant 0 : i32
    %c0_i32_0 = arith.constant 0 : i32
    %c0_i32_1 = arith.constant 0 : i32
    return %arg0, %arg1, %c0_i32, %c0_i32_0 : i32, i32, i32, i32
  }
}

</mosaic_0001>

<llo_original>
// kernel: shuffle_v2_block_s2.1
$region0: #{shuffle_v2_block_s2.1}
  #allocation0 [shape = 'u32[]', space=smem, size = 0x4, offset = 0x4, fixed_abs, tag = 'smem constant byte address 0x4 - core index']
  #allocation1 [shape = 'u32[144,128]{1,0:T(1,128)}', space=vmem, size = 0x12000, scoped, tag = 'internal scratch']
  #allocation2 [shape = 'f32[4,9,9,8]{3,2,1,0:T(8,128)}', space=vmem, size = 0x48000, scoped, tag = 'scratch operand']
  %s0 = inlined_call_operand.vmem [shape: f32[2,4,9,9,4], index: 0, kind: input, shape index: {}]
  %s1 = inlined_call_operand.vmem [shape: bf16[4,8], index: 1, kind: input, shape index: {}]
  %s2 = inlined_call_operand.vmem [shape: f32[1,8], index: 2, kind: input, shape index: {}]
  %s3 = inlined_call_operand.vmem [shape: f32[9,1,8], index: 3, kind: input, shape index: {}]
  %s4 = inlined_call_operand.vmem [shape: f32[1,8], index: 4, kind: input, shape index: {}]
  %s5 = inlined_call_operand.vmem [shape: bf16[8,8], index: 5, kind: input, shape index: {}]
  %s6 = inlined_call_operand.vmem [shape: f32[1,8], index: 6, kind: input, shape index: {}]
  %s7 = inlined_call_operand.vmem [shape: f32[9,1,4], index: 7, kind: input, shape index: {}]
  %s8 = inlined_call_operand.vmem [shape: f32[1,4], index: 8, kind: input, shape index: {}]
  %s9 = inlined_call_operand.vmem [shape: bf16[4,4], index: 9, kind: input, shape index: {}]
  %s10 = inlined_call_operand.vmem [shape: f32[1,4], index: 10, kind: input, shape index: {}]
  %s11 = inlined_call_operand.vmem [shape: f32[2,8,8,4], index: 11, kind: output, shape index: {0}]
  %s12 = inlined_call_operand.vmem [shape: f32[2,8,8,8], index: 12, kind: output, shape index: {1}]
  %13 = xla_tuple %s11, %s12
  %s14 = sld [smem:[#allocation0]]
  $region89: #{shuffle_v2_block_s2.1} parent=0
    _
  %s16 = ssub.s32 1, %s14
  %s17 = scalar_select 0, %s16, %s14
  loop: start=0, step=1, limit=6
  $region2: #{shuffle_v2_block_s2.1} parent=0 // loop_pre_header
    _
  $region3: #{shuffle_v2_block_s2.1} parent=0 // loop_header
    %s19 = sphi 0, %s23
    %p20 = scmp.ge.s32.totalorder %s19, 6
    %s26 = sphi 0, %s38
    %s27 = sphi 0, %s34
    %s28 = sphi 0, %s26
    %s29 = sphi 0, %s27
    %s30 = sphi 0, %s28
    %s31 = sphi 0, %s29
    %s41 = sphi 0, %s43
    %s44 = sphi 0, %s41
    %s45 = sphi 0, %s44
    %s61 = sphi 0, %s45
    %s65 = sphi 0, %s65
    %s67 = sphi 0, %s65
    %s68 = sphi 0, %s67
    %s82 = sphi 0, %s68
    %s86 = sphi 0, %s86
    %s88 = sphi 0, %s86
    %s89 = sphi 0, %s88
    %s103 = sphi 0, %s89
    %s107 = sphi 0, %s107
    %s109 = sphi 0, %s107
    %s110 = sphi 0, %s109
    %s124 = sphi 0, %s110
    %s128 = sphi 0, %s128
    %s130 = sphi 0, %s128
    %s131 = sphi 0, %s130
    %s145 = sphi 0, %s131
    %s149 = sphi 0, %s149
    %s151 = sphi 0, %s149
    %s152 = sphi 0, %s151
    %s166 = sphi 0, %s152
    %s170 = sphi 0, %s170
    %s172 = sphi 0, %s170
    %s173 = sphi 0, %s172
    %s187 = sphi 0, %s173
    %s191 = sphi 0, %s191
    %s193 = sphi 0, %s191
    %s194 = sphi 0, %s193
    %s208 = sphi 0, %s194
    %s212 = sphi 0, %s212
    %s214 = sphi 0, %s212
    %s215 = sphi 0, %s214
    %s229 = sphi 0, %s215
    %s233 = sphi 0, %s233
    %s235 = sphi 0, %s233
    %s236 = sphi 0, %s235
    %s250 = sphi 0, %s236
    %s254 = sphi 0, %s254
    %s256 = sphi 0, %s254
    %s257 = sphi 0, %s256
    %s271 = sphi 0, %s257
    %s279 = sphi 0, %s281
    %s282 = sphi 0, %s279
    %s283 = sphi 0, %s282
    %s299 = sphi 0, %s283
    %s307 = sphi 0, %s309
    %s310 = sphi 0, %s307
    %s311 = sphi 0, %s310
    %s327 = sphi 0, %s311
  $region4: #{shuffle_v2_block_s2.1} parent=0 // loop_header_branch
    %22 = sbr.rel (%p20) target = $region8
  $region5: #{shuffle_v2_block_s2.1} parent=0 // loop_body
    %s24 = ssub.s32 %s19, 1
    %s25 = ssub.s32 %s19, 2
    %s32 = sadd.s32 1, %s27
    %p33 = scmp.ge.s32.totalorder %s32, 2
    %s34 = scalar_select %p33, 0, %s32
    %s35 = sadd.s32 1, %s26
    %s36 = scalar_select %p33, %s35, %s26
    %p37 = scmp.ge.s32.totalorder %s36, 2
    %s38 = scalar_select %p37, 0, %s36
    %s39 = ssub.s32 %s26, %s38
    %p40 = scmp.eq.s32.totalorder %s39, 0
    %s42 = sadd.s32 %s41, 1
    %s43 = scalar_select %p40, %s41, %s42
    %p46 = pneg %p40
    %p47 = scmp.eq.s32.totalorder %s19, 3
    %p48 = por %p46, %p47
    %p49 = scmp.ne.s32.totalorder %s41, %s44
    %p50 = scmp.eq.s32.totalorder %s19, 0
    %p51 = por %p49, %p50
    %p52 = scmp.ne.s32.totalorder %s41, %s44
    %p53 = scmp.eq.s32.totalorder %s24, 3
    %p54 = por %p52, %p53
    %p55 = scmp.ne.s32.totalorder %s44, %s45
    %p56 = scmp.eq.s32.totalorder %s24, 0
    %p57 = por %p55, %p56
    %p58 = scmp.ne.s32.totalorder %s44, %s45
    %p59 = scmp.eq.s32.totalorder %s25, 3
    %p60 = por %p58, %p59
    %p62 = scmp.ne.s32.totalorder %s45, %s61
    %p63 = scmp.eq.s32.totalorder %s25, 0
    %p64 = por %p62, %p63
    %s66 = sadd.s32 %s65, 1
    %p69 = scmp.eq.s32.totalorder %s19, 3
    %p70 = scmp.ne.s32.totalorder %s65, %s67
    %p71 = scmp.eq.s32.totalorder %s19, 0
    %p72 = por %p70, %p71
    %p73 = scmp.ne.s32.totalorder %s65, %s67
    %p74 = scmp.eq.s32.totalorder %s24, 3
    %p75 = por %p73, %p74
    %p76 = scmp.ne.s32.totalorder %s67, %s68
    %p77 = scmp.eq.s32.totalorder %s24, 0
    %p78 = por %p76, %p77
    %p79 = scmp.ne.s32.totalorder %s67, %s68
    %p80 = scmp.eq.s32.totalorder %s25, 3
    %p81 = por %p79, %p80
    %p83 = scmp.ne.s32.totalorder %s68, %s82
    %p84 = scmp.eq.s32.totalorder %s25, 0
    %p85 = por %p83, %p84
    %s87 = sadd.s32 %s86, 1
    %p90 = scmp.eq.s32.totalorder %s19, 3
    %p91 = scmp.ne.s32.totalorder %s86, %s88
    %p92 = scmp.eq.s32.totalorder %s19, 0
    %p93 = por %p91, %p92
    %p94 = scmp.ne.s32.totalorder %s86, %s88
    %p95 = scmp.eq.s32.totalorder %s24, 3
    %p96 = por %p94, %p95
    %p97 = scmp.ne.s32.totalorder %s88, %s89
    %p98 = scmp.eq.s32.totalorder %s24, 0
    %p99 = por %p97, %p98
    %p100 = scmp.ne.s32.totalorder %s88, %s89
    %p101 = scmp.eq.s32.totalorder %s25, 3
    %p102 = por %p100, %p101
    %p104 = scmp.ne.s32.totalorder %s89, %s103
    %p105 = scmp.eq.s32.totalorder %s25, 0
    %p106 = por %p104, %p105
    %s108 = sadd.s32 %s107, 1
    %p111 = scmp.eq.s32.totalorder %s19, 3
    %p112 = scmp.ne.s32.totalorder %s107, %s109
    %p113 = scmp.eq.s32.totalorder %s19, 0
    %p114 = por %p112, %p113
    %p115 = scmp.ne.s32.totalorder %s107, %s109
    %p116 = scmp.eq.s32.totalorder %s24, 3
    %p117 = por %p115, %p116
    %p118 = scmp.ne.s32.totalorder %s109, %s110
    %p119 = scmp.eq.s32.totalorder %s24, 0
    %p120 = por %p118, %p119
    %p121 = scmp.ne.s32.totalorder %s109, %s110
    %p122 = scmp.eq.s32.totalorder %s25, 3
    %p123 = por %p121, %p122
    %p125 = scmp.ne.s32.totalorder %s110, %s124
    %p126 = scmp.eq.s32.totalorder %s25, 0
    %p127 = por %p125, %p126
    %s129 = sadd.s32 %s128, 1
    %p132 = scmp.eq.s32.totalorder %s19, 3
    %p133 = scmp.ne.s32.totalorder %s128, %s130
    %p134 = scmp.eq.s32.totalorder %s19, 0
    %p135 = por %p133, %p134
    %p136 = scmp.ne.s32.totalorder %s128, %s130
    %p137 = scmp.eq.s32.totalorder %s24, 3
    %p138 = por %p136, %p137
    %p139 = scmp.ne.s32.totalorder %s130, %s131
    %p140 = scmp.eq.s32.totalorder %s24, 0
    %p141 = por %p139, %p140
    %p142 = scmp.ne.s32.totalorder %s130, %s131
    %p143 = scmp.eq.s32.totalorder %s25, 3
    %p144 = por %p142, %p143
    %p146 = scmp.ne.s32.totalorder %s131, %s145
    %p147 = scmp.eq.s32.totalorder %s25, 0
    %p148 = por %p146, %p147
    %s150 = sadd.s32 %s149, 1
    %p153 = scmp.eq.s32.totalorder %s19, 3
    %p154 = scmp.ne.s32.totalorder %s149, %s151
    %p155 = scmp.eq.s32.totalorder %s19, 0
    %p156 = por %p154, %p155
    %p157 = scmp.ne.s32.totalorder %s149, %s151
    %p158 = scmp.eq.s32.totalorder %s24, 3
    %p159 = por %p157, %p158
    %p160 = scmp.ne.s32.totalorder %s151, %s152
    %p161 = scmp.eq.s32.totalorder %s24, 0
    %p162 = por %p160, %p161
    %p163 = scmp.ne.s32.totalorder %s151, %s152
    %p164 = scmp.eq.s32.totalorder %s25, 3
    %p165 = por %p163, %p164
    %p167 = scmp.ne.s32.totalorder %s152, %s166
    %p168 = scmp.eq.s32.totalorder %s25, 0
    %p169 = por %p167, %p168
    %s171 = sadd.s32 %s170, 1
    %p174 = scmp.eq.s32.totalorder %s19, 3
    %p175 = scmp.ne.s32.totalorder %s170, %s172
    %p176 = scmp.eq.s32.totalorder %s19, 0
    %p177 = por %p175, %p176
    %p178 = scmp.ne.s32.totalorder %s170, %s172
    %p179 = scmp.eq.s32.totalorder %s24, 3
    %p180 = por %p178, %p179
    %p181 = scmp.ne.s32.totalorder %s172, %s173
    %p182 = scmp.eq.s32.totalorder %s24, 0
    %p183 = por %p181, %p182
    %p184 = scmp.ne.s32.totalorder %s172, %s173
    %p185 = scmp.eq.s32.totalorder %s25, 3
    %p186 = por %p184, %p185
    %p188 = scmp.ne.s32.totalorder %s173, %s187
    %p189 = scmp.eq.s32.totalorder %s25, 0
    %p190 = por %p188, %p189
    %s192 = sadd.s32 %s191, 1
    %p195 = scmp.eq.s32.totalorder %s19, 3
    %p196 = scmp.ne.s32.totalorder %s191, %s193
    %p197 = scmp.eq.s32.totalorder %s19, 0
    %p198 = por %p196, %p197
    %p199 = scmp.ne.s32.totalorder %s191, %s193
    %p200 = scmp.eq.s32.totalorder %s24, 3
    %p201 = por %p199, %p200
    %p202 = scmp.ne.s32.totalorder %s193, %s194
    %p203 = scmp.eq.s32.totalorder %s24, 0
    %p204 = por %p202, %p203
    %p205 = scmp.ne.s32.totalorder %s193, %s194
    %p206 = scmp.eq.s32.totalorder %s25, 3
    %p207 = por %p205, %p206
    %p209 = scmp.ne.s32.totalorder %s194, %s208
    %p210 = scmp.eq.s32.totalorder %s25, 0
    %p211 = por %p209, %p210
    %s213 = sadd.s32 %s212, 1
    %p216 = scmp.eq.s32.totalorder %s19, 3
    %p217 = scmp.ne.s32.totalorder %s212, %s214
    %p218 = scmp.eq.s32.totalorder %s19, 0
    %p219 = por %p217, %p218
    %p220 = scmp.ne.s32.totalorder %s212, %s214
    %p221 = scmp.eq.s32.totalorder %s24, 3
    %p222 = por %p220, %p221
    %p223 = scmp.ne.s32.totalorder %s214, %s215
    %p224 = scmp.eq.s32.totalorder %s24, 0
    %p225 = por %p223, %p224
    %p226 = scmp.ne.s32.totalorder %s214, %s215
    %p227 = scmp.eq.s32.totalorder %s25, 3
    %p228 = por %p226, %p227
    %p230 = scmp.ne.s32.totalorder %s215, %s229
    %p231 = scmp.eq.s32.totalorder %s25, 0
    %p232 = por %p230, %p231
    %s234 = sadd.s32 %s233, 1
    %p237 = scmp.eq.s32.totalorder %s19, 3
    %p238 = scmp.ne.s32.totalorder %s233, %s235
    %p239 = scmp.eq.s32.totalorder %s19, 0
    %p240 = por %p238, %p239
    %p241 = scmp.ne.s32.totalorder %s233, %s235
    %p242 = scmp.eq.s32.totalorder %s24, 3
    %p243 = por %p241, %p242
    %p244 = scmp.ne.s32.totalorder %s235, %s236
    %p245 = scmp.eq.s32.totalorder %s24, 0
    %p246 = por %p244, %p245
    %p247 = scmp.ne.s32.totalorder %s235, %s236
    %p248 = scmp.eq.s32.totalorder %s25, 3
    %p249 = por %p247, %p248
    %p251 = scmp.ne.s32.totalorder %s236, %s250
    %p252 = scmp.eq.s32.totalorder %s25, 0
    %p253 = por %p251, %p252
    %s255 = sadd.s32 %s254, 1
    %p258 = scmp.eq.s32.totalorder %s19, 3
    %p259 = scmp.ne.s32.totalorder %s254, %s256
    %p260 = scmp.eq.s32.totalorder %s19, 0
    %p261 = por %p259, %p260
    %p262 = scmp.ne.s32.totalorder %s254, %s256
    %p263 = scmp.eq.s32.totalorder %s24, 3
    %p264 = por %p262, %p263
    %p265 = scmp.ne.s32.totalorder %s256, %s257
    %p266 = scmp.eq.s32.totalorder %s24, 0
    %p267 = por %p265, %p266
    %p268 = scmp.ne.s32.totalorder %s256, %s257
    %p269 = scmp.eq.s32.totalorder %s25, 3
    %p270 = por %p268, %p269
    %p272 = scmp.ne.s32.totalorder %s257, %s271
    %p273 = scmp.eq.s32.totalorder %s25, 0
    %p274 = por %p272, %p273
    %s275 = ssub.s32 %s26, %s38
    %s276 = ssub.s32 %s27, %s34
    %s277 = sor.u32 %s275, %s276
    %p278 = scmp.eq.s32.totalorder %s277, 0
    %s280 = sadd.s32 %s279, 1
    %s281 = scalar_select %p278, %s279, %s280
    %p284 = pneg %p278
    %p285 = scmp.eq.s32.totalorder %s19, 3
    %p286 = por %p284, %p285
    %p287 = scmp.ne.s32.totalorder %s279, %s282
    %p288 = scmp.eq.s32.totalorder %s19, 0
    %p289 = por %p287, %p288
    %p290 = scmp.ne.s32.totalorder %s279, %s282
    %p291 = scmp.eq.s32.totalorder %s24, 3
    %p292 = por %p290, %p291
    %p293 = scmp.ne.s32.totalorder %s282, %s283
    %p294 = scmp.eq.s32.totalorder %s24, 0
    %p295 = por %p293, %p294
    %p296 = scmp.ne.s32.totalorder %s282, %s283
    %p297 = scmp.eq.s32.totalorder %s25, 3
    %p298 = por %p296, %p297
    %p300 = scmp.ne.s32.totalorder %s283, %s299
    %p301 = scmp.eq.s32.totalorder %s25, 0
    %p302 = por %p300, %p301
    %s303 = ssub.s32 %s26, %s38
    %s304 = ssub.s32 %s27, %s34
    %s305 = sor.u32 %s303, %s304
    %p306 = scmp.eq.s32.totalorder %s305, 0
    %s308 = sadd.s32 %s307, 1
    %s309 = scalar_select %p306, %s307, %s308
    %p312 = pneg %p306
    %p313 = scmp.eq.s32.totalorder %s19, 3
    %p314 = por %p312, %p313
    %p315 = scmp.ne.s32.totalorder %s307, %s310
    %p316 = scmp.eq.s32.totalorder %s19, 0
    %p317 = por %p315, %p316
    %p318 = scmp.ne.s32.totalorder %s307, %s310
    %p319 = scmp.eq.s32.totalorder %s24, 3
    %p320 = por %p318, %p319
    %p321 = scmp.ne.s32.totalorder %s310, %s311
    %p322 = scmp.eq.s32.totalorder %s24, 0
    %p323 = por %p321, %p322
    %p324 = scmp.ne.s32.totalorder %s310, %s311
    %p325 = scmp.eq.s32.totalorder %s25, 3
    %p326 = por %p324, %p325
    %p328 = scmp.ne.s32.totalorder %s311, %s327
    %p329 = scmp.eq.s32.totalorder %s25, 0
    %p330 = por %p328, %p329
    %p331 = scmp.le.s32.totalorder 1, %s19
    %p332 = scmp.lt.s32.totalorder %s19, 5
    %p333 = pnand %p331, %p332
    %p334 = pneg %p333
    // Predicated region
    $region9: #{shuffle_v2_block_s2.1} parent=5 // pred_check
      _
    $region10: #{shuffle_v2_block_s2.1} parent=5 // pred_check_branch
      %336 = sbr.rel (%p333) target = $region12
    $region11: #{shuffle_v2_block_s2.1} parent=5 // pred_region
      %s337 = ssub.s32 %s19, 1
      // Predicated region
      $region13: #{shuffle_v2_block_s2.1} parent=11 // pred_check
        %p338 = pneg %p78
      $region14: #{shuffle_v2_block_s2.1} parent=11 // pred_check_branch
        %340 = sbr.rel (%p338) target = $region16
      $region15: #{shuffle_v2_block_s2.1} parent=11 // pred_region
        _
      $region16: #{shuffle_v2_block_s2.1} parent=11 // pred_fallthru
        _
      // Predicated region
      $region17: #{shuffle_v2_block_s2.1} parent=11 // pred_check
        %p341 = pneg %p99
      $region18: #{shuffle_v2_block_s2.1} parent=11 // pred_check_branch
        %343 = sbr.rel (%p341) target = $region20
      $region19: #{shuffle_v2_block_s2.1} parent=11 // pred_region
        _
      $region20: #{shuffle_v2_block_s2.1} parent=11 // pred_fallthru
        _
      // Predicated region
      $region21: #{shuffle_v2_block_s2.1} parent=11 // pred_check
        %p344 = pneg %p120
      $region22: #{shuffle_v2_block_s2.1} parent=11 // pred_check_branch
        %346 = sbr.rel (%p344) target = $region24
      $region23: #{shuffle_v2_block_s2.1} parent=11 // pred_region
        _
      $region24: #{shuffle_v2_block_s2.1} parent=11 // pred_fallthru
        _
      // Predicated region
      $region25: #{shuffle_v2_block_s2.1} parent=11 // pred_check
        %p347 = pneg %p141
      $region26: #{shuffle_v2_block_s2.1} parent=11 // pred_check_branch
        %349 = sbr.rel (%p347) target = $region28
      $region27: #{shuffle_v2_block_s2.1} parent=11 // pred_region
        _
      $region28: #{shuffle_v2_block_s2.1} parent=11 // pred_fallthru
        _
      // Predicated region
      $region29: #{shuffle_v2_block_s2.1} parent=11 // pred_check
        %p350 = pneg %p162
      $region30: #{shuffle_v2_block_s2.1} parent=11 // pred_check_branch
        %352 = sbr.rel (%p350) target = $region32
      $region31: #{shuffle_v2_block_s2.1} parent=11 // pred_region
        _
      $region32: #{shuffle_v2_block_s2.1} parent=11 // pred_fallthru
        _
      // Predicated region
      $region33: #{shuffle_v2_block_s2.1} parent=11 // pred_check
        %p353 = pneg %p183
      $region34: #{shuffle_v2_block_s2.1} parent=11 // pred_check_branch
        %355 = sbr.rel (%p353) target = $region36
      $region35: #{shuffle_v2_block_s2.1} parent=11 // pred_region
        _
      $region36: #{shuffle_v2_block_s2.1} parent=11 // pred_fallthru
        _
      // Predicated region
      $region37: #{shuffle_v2_block_s2.1} parent=11 // pred_check
        %p356 = pneg %p204
      $region38: #{shuffle_v2_block_s2.1} parent=11 // pred_check_branch
        %358 = sbr.rel (%p356) target = $region40
      $region39: #{shuffle_v2_block_s2.1} parent=11 // pred_region
        _
      $region40: #{shuffle_v2_block_s2.1} parent=11 // pred_fallthru
        _
      // Predicated region
      $region41: #{shuffle_v2_block_s2.1} parent=11 // pred_check
        %p359 = pneg %p225
      $region42: #{shuffle_v2_block_s2.1} parent=11 // pred_check_branch
        %361 = sbr.rel (%p359) target = $region44
      $region43: #{shuffle_v2_block_s2.1} parent=11 // pred_region
        _
      $region44: #{shuffle_v2_block_s2.1} parent=11 // pred_fallthru
        _
      // Predicated region
      $region45: #{shuffle_v2_block_s2.1} parent=11 // pred_check
        %p362 = pneg %p246
      $region46: #{shuffle_v2_block_s2.1} parent=11 // pred_check_branch
        %364 = sbr.rel (%p362) target = $region48
      $region47: #{shuffle_v2_block_s2.1} parent=11 // pred_region
        _
      $region48: #{shuffle_v2_block_s2.1} parent=11 // pred_fallthru
        _
      // Predicated region
      $region49: #{shuffle_v2_block_s2.1} parent=11 // pred_check
        %p365 = pneg %p267
      $region50: #{shuffle_v2_block_s2.1} parent=11 // pred_check_branch
        %367 = sbr.rel (%p365) target = $region52
      $region51: #{shuffle_v2_block_s2.1} parent=11 // pred_region
        _
      $region52: #{shuffle_v2_block_s2.1} parent=11 // pred_fallthru
        _
    $region12: #{shuffle_v2_block_s2.1} parent=5 // pred_fallthru
      _
    %p368 = scmp.lt.s32.totalorder %s19, 4
    // Predicated region
    $region53: #{shuffle_v2_block_s2.1} parent=5 // pred_check
      %p369 = pneg %p368
    $region54: #{shuffle_v2_block_s2.1} parent=5 // pred_check_branch
      %371 = sbr.rel (%p369) target = $region56
    $region55: #{shuffle_v2_block_s2.1} parent=5 // pred_region
      // Predicated region
      $region57: #{shuffle_v2_block_s2.1} parent=55 // pred_check
        %p372 = pneg %p51
      $region58: #{shuffle_v2_block_s2.1} parent=55 // pred_check_branch
        %374 = sbr.rel (%p372) target = $region60
      $region59: #{shuffle_v2_block_s2.1} parent=55 // pred_region
        %p375 = scmp.lt.s32.totalorder %s26, 1
        %s376 = scalar_select %p375, %s26, 1
        %s377 = smul.addr %s376, 72
        %s378 = smul.addr %s377, 8
        %s379 = scalar_lea.vmem %s0, %s378
      $region60: #{shuffle_v2_block_s2.1} parent=55 // pred_fallthru
        _
    $region56: #{shuffle_v2_block_s2.1} parent=5 // pred_fallthru
      _
    %p380 = scmp.le.s32.totalorder 1, %s19
    %p381 = scmp.lt.s32.totalorder %s19, 5
    %p382 = pnand %p380, %p381
    %p383 = pneg %p382
    // Predicated region
    $region61: #{shuffle_v2_block_s2.1} parent=5 // pred_check
      _
    $region62: #{shuffle_v2_block_s2.1} parent=5 // pred_check_branch
      %385 = sbr.rel (%p382) target = $region64
    $region63: #{shuffle_v2_block_s2.1} parent=5 // pred_region
      %s386 = ssub.s32 %s19, 1
      %p387 = scmp.lt.s32.totalorder %s28, 1
      %s388 = scalar_select %p387, %s28, 1
      %s389 = smul.addr %s388, 72
      %s390 = smul.addr %s389, 8
      %s391 = scalar_lea.vmem %s0, %s390
      %p392 = pneg %p57
      %p393 = pneg %p54
      %p394 = pneg %p78
      %p395 = pneg %p75
      %p396 = pneg %p99
      %p397 = pneg %p96
      %p398 = pneg %p120
      %p399 = pneg %p117
      %p400 = pneg %p141
      %p401 = pneg %p138
      %p402 = pneg %p162
      %p403 = pneg %p159
      %p404 = pneg %p183
      %p405 = pneg %p180
      %p406 = pneg %p204
      %p407 = pneg %p201
      %p408 = pneg %p225
      %p409 = pneg %p222
      %p410 = pneg %p246
      %p411 = pneg %p243
      %p412 = pneg %p267
      %p413 = pneg %p264
      %p414 = pneg %p295
      %p415 = pneg %p292
      %s416 = smul.u32 4, %s29
      %p417 = scmp.lt.s32.totalorder %s28, 1
      %s418 = scalar_select %p417, %s28, 1
      %p419 = scmp.lt.s32.totalorder %s416, 7
      %s420 = scalar_select %p419, %s416, 7
      %s421 = smul.addr %s418, 8
      %s422 = sadd.s32 %s420, %s421
      %s423 = smul.addr %s422, 8
      %s424 = scalar_lea.vmem %s11, %s423
      %p425 = pneg %p323
      %p426 = pneg %p320
      %s427 = smul.u32 4, %s29
      %p428 = scmp.lt.s32.totalorder %s28, 1
      %s429 = scalar_select %p428, %s28, 1
      %p430 = scmp.lt.s32.totalorder %s427, 7
      %s431 = scalar_select %p430, %s427, 7
      %s432 = smul.addr %s429, 8
      %s433 = sadd.s32 %s431, %s432
      %s434 = smul.addr %s433, 8
      %s435 = scalar_lea.vmem %s12, %s434
      %p436 = scmp.lt.s32.totalorder %s28, 1
      %s437 = scalar_select %p436, %s28, 1
      %s438 = smul.addr %s437, 72
      %s439 = smul.addr %s438, 8
      %s440 = scalar_lea.vmem %s0, %s439
      %s441 = smul.u32 4, %s29
      %p442 = scmp.lt.s32.totalorder %s28, 1
      %s443 = scalar_select %p442, %s28, 1
      %p444 = scmp.lt.s32.totalorder %s441, 7
      %s445 = scalar_select %p444, %s441, 7
      %s446 = smul.addr %s443, 8
      %s447 = sadd.s32 %s445, %s446
      %s448 = smul.addr %s447, 8
      %s449 = scalar_lea.vmem %s11, %s448
      %s450 = smul.u32 4, %s29
      %s451 = smul.u32 4, %s29
      %p452 = scmp.lt.s32.totalorder %s28, 1
      %s453 = scalar_select %p452, %s28, 1
      %p454 = scmp.lt.s32.totalorder %s451, 7
      %s455 = scalar_select %p454, %s451, 7
      %s456 = smul.addr %s453, 8
      %s457 = sadd.s32 %s455, %s456
      %s458 = smul.addr %s457, 8
      %s459 = scalar_lea.vmem %s12, %s458
      %s460 = smul.u32 4, %s29
      %p462 = scmp.eq.s32.totalorder %s29, 0
      // Predicated region
      $region65: #{shuffle_v2_block_s2.1} parent=63 // pred_check
        %p463 = pneg %p462
      $region66: #{shuffle_v2_block_s2.1} parent=63 // pred_check_branch
        %465 = sbr.rel (%p463) target = $region68
      $region67: #{shuffle_v2_block_s2.1} parent=63 // pred_region
        %vm466 = vcmask 64512
        %467 = vst.msk [vmem:[#allocation2] sm:$0xff] %vm466, 0.0
        %vm468 = vcmask 57344
        %469 = vst.msk [vmem:[#allocation2 + $0x8] sm:$0x1] %vm468, 0.0
        %470 = vst.msk [vmem:[#allocation2 + $0x10] sm:$0xff] %vm466, 0.0
        %471 = vst.msk [vmem:[#allocation2 + $0x18] sm:$0x1] %vm468, 0.0
        %472 = vst.msk [vmem:[#allocation2 + $0x20] sm:$0xff] %vm466, 0.0
        %473 = vst.msk [vmem:[#allocation2 + $0x28] sm:$0x1] %vm468, 0.0
        %474 = vst.msk [vmem:[#allocation2 + $0x30] sm:$0xff] %vm466, 0.0
        %475 = vst.msk [vmem:[#allocation2 + $0x38] sm:$0x1] %vm468, 0.0
        %476 = vst.msk [vmem:[#allocation2 + $0x40] sm:$0xff] %vm466, 0.0
        %477 = vst.msk [vmem:[#allocation2 + $0x48] sm:$0x1] %vm468, 0.0
        %478 = vst.msk [vmem:[#allocation2 + $0x50] sm:$0xff] %vm466, 0.0
        %479 = vst.msk [vmem:[#allocation2 + $0x58] sm:$0x1] %vm468, 0.0
        %480 = vst.msk [vmem:[#allocation2 + $0x60] sm:$0xff] %vm466, 0.0
        %481 = vst.msk [vmem:[#allocation2 + $0x68] sm:$0x1] %vm468, 0.0
        %482 = vst.msk [vmem:[#allocation2 + $0x70] sm:$0xff] %vm466, 0.0
        %483 = vst.msk [vmem:[#allocation2 + $0x78] sm:$0x1] %vm468, 0.0
        %484 = vst.msk [vmem:[#allocation2 + $0x80] sm:$0xff] %vm466, 0.0
        %485 = vst.msk [vmem:[#allocation2 + $0x88] sm:$0x1] %vm468, 0.0
        %486 = vst.msk [vmem:[#allocation2 + $0x90] sm:$0xff] %vm466, 0.0
        %487 = vst.msk [vmem:[#allocation2 + $0x98] sm:$0x1] %vm468, 0.0
        %488 = vst.msk [vmem:[#allocation2 + $0xa0] sm:$0xff] %vm466, 0.0
        %489 = vst.msk [vmem:[#allocation2 + $0xa8] sm:$0x1] %vm468, 0.0
        %490 = vst.msk [vmem:[#allocation2 + $0xb0] sm:$0xff] %vm466, 0.0
        %491 = vst.msk [vmem:[#allocation2 + $0xb8] sm:$0x1] %vm468, 0.0
        %492 = vst.msk [vmem:[#allocation2 + $0xc0] sm:$0xff] %vm466, 0.0
        %493 = vst.msk [vmem:[#allocation2 + $0xc8] sm:$0x1] %vm468, 0.0
        %494 = vst.msk [vmem:[#allocation2 + $0xd0] sm:$0xff] %vm466, 0.0
        %495 = vst.msk [vmem:[#allocation2 + $0xd8] sm:$0x1] %vm468, 0.0
        %496 = vst.msk [vmem:[#allocation2 + $0xe0] sm:$0xff] %vm466, 0.0
        %497 = vst.msk [vmem:[#allocation2 + $0xe8] sm:$0x1] %vm468, 0.0
        %498 = vst.msk [vmem:[#allocation2 + $0xf0] sm:$0xff] %vm466, 0.0
        %499 = vst.msk [vmem:[#allocation2 + $0xf8] sm:$0x1] %vm468, 0.0
        %500 = vst.msk [vmem:[#allocation2 + $0x100] sm:$0xff] %vm466, 0.0
        %501 = vst.msk [vmem:[#allocation2 + $0x108] sm:$0x1] %vm468, 0.0
        %502 = vst.msk [vmem:[#allocation2 + $0x110] sm:$0xff] %vm466, 0.0
        %503 = vst.msk [vmem:[#allocation2 + $0x118] sm:$0x1] %vm468, 0.0
        %504 = vst.msk [vmem:[#allocation2 + $0x120] sm:$0xff] %vm466, 0.0
        %505 = vst.msk [vmem:[#allocation2 + $0x128] sm:$0x1] %vm468, 0.0
        %506 = vst.msk [vmem:[#allocation2 + $0x130] sm:$0xff] %vm466, 0.0
        %507 = vst.msk [vmem:[#allocation2 + $0x138] sm:$0x1] %vm468, 0.0
        %508 = vst.msk [vmem:[#allocation2 + $0x140] sm:$0xff] %vm466, 0.0
        %509 = vst.msk [vmem:[#allocation2 + $0x148] sm:$0x1] %vm468, 0.0
        %510 = vst.msk [vmem:[#allocation2 + $0x150] sm:$0xff] %vm466, 0.0
        %511 = vst.msk [vmem:[#allocation2 + $0x158] sm:$0x1] %vm468, 0.0
        %512 = vst.msk [vmem:[#allocation2 + $0x160] sm:$0xff] %vm466, 0.0
        %513 = vst.msk [vmem:[#allocation2 + $0x168] sm:$0x1] %vm468, 0.0
        %514 = vst.msk [vmem:[#allocation2 + $0x170] sm:$0xff] %vm466, 0.0
        %515 = vst.msk [vmem:[#allocation2 + $0x178] sm:$0x1] %vm468, 0.0
        %516 = vst.msk [vmem:[#allocation2 + $0x180] sm:$0xff] %vm466, 0.0
        %517 = vst.msk [vmem:[#allocation2 + $0x188] sm:$0x1] %vm468, 0.0
        %518 = vst.msk [vmem:[#allocation2 + $0x190] sm:$0xff] %vm466, 0.0
        %519 = vst.msk [vmem:[#allocation2 + $0x198] sm:$0x1] %vm468, 0.0
        %520 = vst.msk [vmem:[#allocation2 + $0x1a0] sm:$0xff] %vm466, 0.0
        %521 = vst.msk [vmem:[#allocation2 + $0x1a8] sm:$0x1] %vm468, 0.0
        %522 = vst.msk [vmem:[#allocation2 + $0x1b0] sm:$0xff] %vm466, 0.0
        %523 = vst.msk [vmem:[#allocation2 + $0x1b8] sm:$0x1] %vm468, 0.0
        %524 = vst.msk [vmem:[#allocation2 + $0x1c0] sm:$0xff] %vm466, 0.0
        %525 = vst.msk [vmem:[#allocation2 + $0x1c8] sm:$0x1] %vm468, 0.0
        %526 = vst.msk [vmem:[#allocation2 + $0x1d0] sm:$0xff] %vm466, 0.0
        %527 = vst.msk [vmem:[#allocation2 + $0x1d8] sm:$0x1] %vm468, 0.0
        %528 = vst.msk [vmem:[#allocation2 + $0x1e0] sm:$0xff] %vm466, 0.0
        %529 = vst.msk [vmem:[#allocation2 + $0x1e8] sm:$0x1] %vm468, 0.0
        %530 = vst.msk [vmem:[#allocation2 + $0x1f0] sm:$0xff] %vm466, 0.0
        %531 = vst.msk [vmem:[#allocation2 + $0x1f8] sm:$0x1] %vm468, 0.0
        %532 = vst.msk [vmem:[#allocation2 + $0x200] sm:$0xff] %vm466, 0.0
        %533 = vst.msk [vmem:[#allocation2 + $0x208] sm:$0x1] %vm468, 0.0
        %534 = vst.msk [vmem:[#allocation2 + $0x210] sm:$0xff] %vm466, 0.0
        %535 = vst.msk [vmem:[#allocation2 + $0x218] sm:$0x1] %vm468, 0.0
        %536 = vst.msk [vmem:[#allocation2 + $0x220] sm:$0xff] %vm466, 0.0
        %537 = vst.msk [vmem:[#allocation2 + $0x228] sm:$0x1] %vm468, 0.0
        %538 = vst.msk [vmem:[#allocation2 + $0x230] sm:$0xff] %vm466, 0.0
        %539 = vst.msk [vmem:[#allocation2 + $0x238] sm:$0x1] %vm468, 0.0
        %v540 = vld [vmem:[%s1] sm:$0x3]
        %v541 = vld [vmem:[%s2] sm:$0x1]
        %s542 = scalar_lea.vmem %s440, 16
        %v543 = vld [vmem:[%s542 + $0x1] sm:$0xff]
        %v544 = vld [vmem:[%s542 + $0x11] sm:$0xff]
        %v545 = vld [vmem:[%s542 + $0x21] sm:$0xff]
        %v546 = vld [vmem:[%s542 + $0x31] sm:$0xff]
        %v547 = vld [vmem:[%s542 + $0x41] sm:$0xff]
        %v548 = vld [vmem:[%s542 + $0x51] sm:$0xff]
        %v549 = vld [vmem:[%s542 + $0x61] sm:$0xff]
        %v550 = vld [vmem:[%s542 + $0x71] sm:$0xff]
        %v551 = vpack.c.bf16 %v544, %v543
        %v552 = vpack.c.bf16 %v546, %v545
        %v553 = vpack.c.bf16 %v548, %v547
        %v554 = vpack.c.bf16 %v550, %v549
        %v556 = vlaneseq
        %v557 = vshrl.u32 %v556, 7
        %v558 = vsub.s32 0, %v557
        %v559 = vrot.slane %v541, %v558
        %vm561 = vcmask 31744
        %v563 = vsel %vm561, %v551, 0
        %v566 = vsel %vm561, %v552, 0
        %v569 = vsel %vm561, %v553, 0
        %v572 = vsel %vm561, %v554, 0
        %vm574 = vcmask 1041408
        %v576 = vsel %vm574, %v540, 0
        %578 = vmatprep.subr.bf16.mxu0 0
        %579 = vmatpush1.bf16.msra.mxu0 %v576
        %580 = vmatprep.subr.bf16.mxu0 0
        %581 = vmatpush1.bf16.msra.mxu0 0
        %582 = vmatprep.subr.bf16.mxu0 0
        %583 = vmatpush1.bf16.msra.mxu0 0
        %584 = vmatprep.subr.bf16.mxu0 0
        %585 = vmatpush1.bf16.msra.mxu0 0
        %586 = vmatprep.subr.bf16.mxu0 0
        %587 = vmatpush1.bf16.msra.mxu0 0
        %588 = vmatprep.subr.bf16.mxu0 0
        %589 = vmatpush1.bf16.msra.mxu0 0
        %590 = vmatprep.subr.bf16.mxu0 0
        %591 = vmatpush1.bf16.msra.mxu0 0
        %592 = vmatprep.subr.bf16.mxu0 0
        %593 = vmatpush1.bf16.msra.mxu0 0
        %594 = vmatprep.subr.bf16.mxu0 0
        %595 = vmatpush1.bf16.msra.mxu0 0
        %596 = vmatprep.subr.bf16.mxu0 0
        %597 = vmatpush1.bf16.msra.mxu0 0
        %598 = vmatprep.subr.bf16.mxu0 0
        %599 = vmatpush1.bf16.msra.mxu0 0
        %600 = vmatprep.subr.bf16.mxu0 0
        %601 = vmatpush1.bf16.msra.mxu0 0
        %602 = vmatprep.subr.bf16.mxu0 0
        %603 = vmatpush1.bf16.msra.mxu0 0
        %604 = vmatprep.subr.bf16.mxu0 0
        %605 = vmatpush1.bf16.msra.mxu0 0
        %606 = vmatprep.subr.bf16.mxu0 0
        %607 = vmatpush1.bf16.msra.mxu0 0
        %608 = vmatprep.subr.bf16.mxu0 0
        %609 = vmatpush1.bf16.msra.mxu0 0
        %610 = vmatprep.mubr.bf16.mxu0 0
        %611 = vmatmul.mubr.bf16.gmra.mrb[0].mxu0 %v563
        %v612 = vpop.f32.mrb[0].mxu0
        %v613 = vadd.f32 %v559, %v612
        %v614 = vpop.f32.mrb[0].mxu0
        %v615 = vpop.f32.mrb[0].mxu0
        %v616 = vadd.f32 %v559, %v615
        %v617 = vpop.f32.mrb[0].mxu0
        %618 = vmatprep.mubr.bf16.mxu0 0
        %619 = vmatmul.mubr.bf16.gmra.mrb[0].mxu0 %v566
        %v620 = vpop.f32.mrb[0].mxu0
        %v621 = vadd.f32 %v559, %v620
        %v622 = vpop.f32.mrb[0].mxu0
        %v623 = vpop.f32.mrb[0].mxu0
        %v624 = vadd.f32 %v559, %v623
        %v625 = vpop.f32.mrb[0].mxu0
        %626 = vmatprep.mubr.bf16.mxu0 0
        %627 = vmatmul.mubr.bf16.gmra.mrb[0].mxu0 %v569
        %v628 = vpop.f32.mrb[0].mxu0
        %v629 = vadd.f32 %v559, %v628
        %v630 = vpop.f32.mrb[0].mxu0
        %v631 = vpop.f32.mrb[0].mxu0
        %v632 = vadd.f32 %v559, %v631
        %v633 = vpop.f32.mrb[0].mxu0
        %634 = vmatprep.mubr.bf16.mxu0 0
        %635 = vmatmul.mubr.bf16.gmra.mrb[0].mxu0 %v572
        %v636 = vpop.f32.mrb[0].mxu0
        %v637 = vadd.f32 %v559, %v636
        %v638 = vpop.f32.mrb[0].mxu0
        %v639 = vpop.f32.mrb[0].mxu0
        %v640 = vadd.f32 %v559, %v639
        %v641 = vpop.f32.mrb[0].mxu0
        %642 = vdwg.mxu0
        %v643 = vmax.f32 %v613, 0.0
        %v644 = vmax.f32 %v616, 0.0
        %v645 = vmax.f32 %v621, 0.0
        %v646 = vmax.f32 %v624, 0.0
        %v647 = vmax.f32 %v629, 0.0
        %v648 = vmax.f32 %v632, 0.0
        %v649 = vmax.f32 %v637, 0.0
        %v650 = vmax.f32 %v640, 0.0
        %s651 = scalar_lea.vmem [#allocation2], 16
        %652 = vst.msk [vmem:[%s651 + $0x1] sm:$0xff] %vm466, %v643
        %653 = vst.msk [vmem:[%s651 + $0x11] sm:$0xff] %vm466, %v644
        %654 = vst.msk [vmem:[%s651 + $0x21] sm:$0xff] %vm466, %v645
        %655 = vst.msk [vmem:[%s651 + $0x31] sm:$0xff] %vm466, %v646
        %656 = vst.msk [vmem:[%s651 + $0x41] sm:$0xff] %vm466, %v647
        %657 = vst.msk [vmem:[%s651 + $0x51] sm:$0xff] %vm466, %v648
        %658 = vst.msk [vmem:[%s651 + $0x61] sm:$0xff] %vm466, %v649
        %659 = vst.msk [vmem:[%s651 + $0x71] sm:$0xff] %vm466, %v650
        %s660 = scalar_lea.vmem %s440, 160
        %v661 = vld [vmem:[%s660] sm:$0xff]
        %v662 = vld [vmem:[%s660 + $0x10] sm:$0xff]
        %v663 = vld [vmem:[%s660 + $0x20] sm:$0xff]
        %v664 = vld [vmem:[%s660 + $0x30] sm:$0xff]
        %v665 = vld [vmem:[%s660 + $0x40] sm:$0xff]
        %v666 = vld [vmem:[%s660 + $0x50] sm:$0xff]
        %v667 = vld [vmem:[%s660 + $0x60] sm:$0xff]
        %v668 = vld [vmem:[%s660 + $0x70] sm:$0xff]
        %v669 = vpack.c.bf16 %v662, %v661
        %v670 = vpack.c.bf16 %v664, %v663
        %v671 = vpack.c.bf16 %v666, %v665
        %v672 = vpack.c.bf16 %v668, %v667
        %v674 = vsel %vm561, %v669, 0
        %v677 = vsel %vm561, %v670, 0
        %v680 = vsel %vm561, %v671, 0
        %v683 = vsel %vm561, %v672, 0
        %685 = vmatprep.subr.bf16.mxu0 0
        %686 = vmatpush1.bf16.msra.mxu0 %v576
        %687 = vmatprep.subr.bf16.mxu0 0
        %688 = vmatpush1.bf16.msra.mxu0 0
        %689 = vmatprep.subr.bf16.mxu0 0
        %690 = vmatpush1.bf16.msra.mxu0 0
        %691 = vmatprep.subr.bf16.mxu0 0
        %692 = vmatpush1.bf16.msra.mxu0 0
        %693 = vmatprep.subr.bf16.mxu0 0
        %694 = vmatpush1.bf16.msra.mxu0 0
        %695 = vmatprep.subr.bf16.mxu0 0
        %696 = vmatpush1.bf16.msra.mxu0 0
        %697 = vmatprep.subr.bf16.mxu0 0
        %698 = vmatpush1.bf16.msra.mxu0 0
        %699 = vmatprep.subr.bf16.mxu0 0
        %700 = vmatpush1.bf16.msra.mxu0 0
        %701 = vmatprep.subr.bf16.mxu0 0
        %702 = vmatpush1.bf16.msra.mxu0 0
        %703 = vmatprep.subr.bf16.mxu0 0
        %704 = vmatpush1.bf16.msra.mxu0 0
        %705 = vmatprep.subr.bf16.mxu0 0
        %706 = vmatpush1.bf16.msra.mxu0 0
        %707 = vmatprep.subr.bf16.mxu0 0
        %708 = vmatpush1.bf16.msra.mxu0 0
        %709 = vmatprep.subr.bf16.mxu0 0
        %710 = vmatpush1.bf16.msra.mxu0 0
        %711 = vmatprep.subr.bf16.mxu0 0
        %712 = vmatpush1.bf16.msra.mxu0 0
        %713 = vmatprep.subr.bf16.mxu0 0
        %714 = vmatpush1.bf16.msra.mxu0 0
        %715 = vmatprep.subr.bf16.mxu0 0
        %716 = vmatpush1.bf16.msra.mxu0 0
        %717 = vmatprep.mubr.bf16.mxu0 0
        %718 = vmatmul.mubr.bf16.gmra.mrb[0].mxu0 %v674
        %v719 = vpop.f32.mrb[0].mxu0
        %v720 = vadd.f32 %v559, %v719
        %v721 = vpop.f32.mrb[0].mxu0
        %v722 = vpop.f32.mrb[0].mxu0
        %v723 = vadd.f32 %v559, %v722
        %v724 = vpop.f32.mrb[0].mxu0
        %725 = vmatprep.mubr.bf16.mxu0 0
        %726 = vmatmul.mubr.bf16.gmra.mrb[0].mxu0 %v677
        %v727 = vpop.f32.mrb[0].mxu0
        %v728 = vadd.f32 %v559, %v727
        %v729 = vpop.f32.mrb[0].mxu0
        %v730 = vpop.f32.mrb[0].mxu0
        %v731 = vadd.f32 %v559, %v730
        %v732 = vpop.f32.mrb[0].mxu0
        %733 = vmatprep.mubr.bf16.mxu0 0
        %734 = vmatmul.mubr.bf16.gmra.mrb[0].mxu0 %v680
        %v735 = vpop.f32.mrb[0].mxu0
        %v736 = vadd.f32 %v559, %v735
        %v737 = vpop.f32.mrb[0].mxu0
        %v738 = vpop.f32.mrb[0].mxu0
        %v739 = vadd.f32 %v559, %v738
        %v740 = vpop.f32.mrb[0].mxu0
        %741 = vmatprep.mubr.bf16.mxu0 0
        %742 = vmatmul.mubr.bf16.gmra.mrb[0].mxu0 %v683
        %v743 = vpop.f32.mrb[0].mxu0
        %v744 = vadd.f32 %v559, %v743
        %v745 = vpop.f32.mrb[0].mxu0
        %v746 = vpop.f32.mrb[0].mxu0
        %v747 = vadd.f32 %v559, %v746
        %v748 = vpop.f32.mrb[0].mxu0
        %749 = vdwg.mxu0
        %v750 = vmax.f32 %v720, 0.0
        %v751 = vmax.f32 %v723, 0.0
        %v752 = vmax.f32 %v728, 0.0
        %v753 = vmax.f32 %v731, 0.0
        %v754 = vmax.f32 %v736, 0.0
        %v755 = vmax.f32 %v739, 0.0
        %v756 = vmax.f32 %v744, 0.0
        %v757 = vmax.f32 %v747, 0.0
        %s758 = scalar_lea.vmem [#allocation2], 160
        %759 = vst.msk [vmem:[%s758] sm:$0xff] %vm466, %v750
        %760 = vst.msk [vmem:[%s758 + $0x10] sm:$0xff] %vm466, %v751
        %761 = vst.msk [vmem:[%s758 + $0x20] sm:$0xff] %vm466, %v752
        %762 = vst.msk [vmem:[%s758 + $0x30] sm:$0xff] %vm466, %v753
        %763 = vst.msk [vmem:[%s758 + $0x40] sm:$0xff] %vm466, %v754
        %764 = vst.msk [vmem:[%s758 + $0x50] sm:$0xff] %vm466, %v755
        %765 = vst.msk [vmem:[%s758 + $0x60] sm:$0xff] %vm466, %v756
        %766 = vst.msk [vmem:[%s758 + $0x70] sm:$0xff] %vm466, %v757
        %s767 = scalar_lea.vmem %s440, 288
        %v768 = vld [vmem:[%s767 + $0x1] sm:$0xff]
        %v769 = vld [vmem:[%s767 + $0x11] sm:$0xff]
        %v770 = vld [vmem:[%s767 + $0x21] sm:$0xff]
        %v771 = vld [vmem:[%s767 + $0x31] sm:$0xff]
        %v772 = vld [vmem:[%s767 + $0x41] sm:$0xff]
        %v773 = vld [vmem:[%s767 + $0x51] sm:$0xff]
        %v774 = vld [vmem:[%s767 + $0x61] sm:$0xff]
        %v775 = vld [vmem:[%s767 + $0x71] sm:$0xff]
        %v776 = vpack.c.bf16 %v769, %v768
        %v777 = vpack.c.bf16 %v771, %v770
        %v778 = vpack.c.bf16 %v773, %v772
        %v779 = vpack.c.bf16 %v775, %v774
        %v781 = vsel %vm561, %v776, 0
        %v784 = vsel %vm561, %v777, 0
        %v787 = vsel %vm561, %v778, 0
        %v790 = vsel %vm561, %v779, 0
        %792 = vmatprep.subr.bf16.mxu0 0
        %793 = vmatpush1.bf16.msra.mxu0 %v576
        %794 = vmatprep.subr.bf16.mxu0 0
        %795 = vmatpush1.bf16.msra.mxu0 0
        %796 = vmatprep.subr.bf16.mxu0 0
        %797 = vmatpush1.bf16.msra.mxu0 0
        %798 = vmatprep.subr.bf16.mxu0 0
        %799 = vmatpush1.bf16.msra.mxu0 0
        %800 = vmatprep.subr.bf16.mxu0 0
        %801 = vmatpush1.bf16.msra.mxu0 0
        %802 = vmatprep.subr.bf16.mxu0 0
        %803 = vmatpush1.bf16.msra.mxu0 0
        %804 = vmatprep.subr.bf16.mxu0 0
        %805 = vmatpush1.bf16.msra.mxu0 0
        %806 = vmatprep.subr.bf16.mxu0 0
        %807 = vmatpush1.bf16.msra.mxu0 0
        %808 = vmatprep.subr.bf16.mxu0 0
        %809 = vmatpush1.bf16.msra.mxu0 0
        %810 = vmatprep.subr.bf16.mxu0 0
        %811 = vmatpush1.bf16.msra.mxu0 0
        %812 = vmatprep.subr.bf16.mxu0 0
        %813 = vmatpush1.bf16.msra.mxu0 0
        %814 = vmatprep.subr.bf16.mxu0 0
        %815 = vmatpush1.bf16.msra.mxu0 0
        %816 = vmatprep.subr.bf16.mxu0 0
        %817 = vmatpush1.bf16.msra.mxu0 0
        %818 = vmatprep.subr.bf16.mxu0 0
        %819 = vmatpush1.bf16.msra.mxu0 0
        %820 = vmatprep.subr.bf16.mxu0 0
        %821 = vmatpush1.bf16.msra.mxu0 0
        %822 = vmatprep.subr.bf16.mxu0 0
        %823 = vmatpush1.bf16.msra.mxu0 0
        %824 = vmatprep.mubr.bf16.mxu0 0
        %825 = vmatmul.mubr.bf16.gmra.mrb[0].mxu0 %v781
        %v826 = vpop.f32.mrb[0].mxu0
        %v827 = vadd.f32 %v559, %v826
        %v828 = vpop.f32.mrb[0].mxu0
        %v829 = vpop.f32.mrb[0].mxu0
        %v830 = vadd.f32 %v559, %v829
        %v831 = vpop.f32.mrb[0].mxu0
        %832 = vmatprep.mubr.bf16.mxu0 0
        %833 = vmatmul.mubr.bf16.gmra.mrb[0].mxu0 %v784
        %v834 = vpop.f32.mrb[0].mxu0
        %v835 = vadd.f32 %v559, %v834
        %v836 = vpop.f32.mrb[0].mxu0
        %v837 = vpop.f32.mrb[0].mxu0
        %v838 = vadd.f32 %v559, %v837
        %v839 = vpop.f32.mrb[0].mxu0
        %840 = vmatprep.mubr.bf16.mxu0 0
        %841 = vmatmul.mubr.bf16.gmra.mrb[0].mxu0 %v787
        %v842 = vpop.f32.mrb[0].mxu0
        %v843 = vadd.f32 %v559, %v842
        %v844 = vpop.f32.mrb[0].mxu0
        %v845 = vpop.f32.mrb[0].mxu0
        %v846 = vadd.f32 %v559, %v845
        %v847 = vpop.f32.mrb[0].mxu0
        %848 = vmatprep.mubr.bf16.mxu0 0
        %849 = vmatmul.mubr.bf16.gmra.mrb[0].mxu0 %v790
        %v850 = vpop.f32.mrb[0].mxu0
        %v851 = vadd.f32 %v559, %v850
        %v852 = vpop.f32.mrb[0].mxu0
        %v853 = vpop.f32.mrb[0].mxu0
        %v854 = vadd.f32 %v559, %v853
        %v855 = vpop.f32.mrb[0].mxu0
        %856 = vdwg.mxu0
        %v857 = vmax.f32 %v827, 0.0
        %v858 = vmax.f32 %v830, 0.0
        %v859 = vmax.f32 %v835, 0.0
        %v860 = vmax.f32 %v838, 0.0
        %v861 = vmax.f32 %v843, 0.0
        %v862 = vmax.f32 %v846, 0.0
        %v863 = vmax.f32 %v851, 0.0
        %v864 = vmax.f32 %v854, 0.0
        %s865 = scalar_lea.vmem [#allocation2], 288
        %866 = vst.msk [vmem:[%s865 + $0x1] sm:$0xff] %vm466, %v857
        %867 = vst.msk [vmem:[%s865 + $0x11] sm:$0xff] %vm466, %v858
        %868 = vst.msk [vmem:[%s865 + $0x21] sm:$0xff] %vm466, %v859
        %869 = vst.msk [vmem:[%s865 + $0x31] sm:$0xff] %vm466, %v860
        %870 = vst.msk [vmem:[%s865 + $0x41] sm:$0xff] %vm466, %v861
        %871 = vst.msk [vmem:[%s865 + $0x51] sm:$0xff] %vm466, %v862
        %872 = vst.msk [vmem:[%s865 + $0x61] sm:$0xff] %vm466, %v863
        %873 = vst.msk [vmem:[%s865 + $0x71] sm:$0xff] %vm466, %v864
        %s874 = scalar_lea.vmem %s440, 432
        %v875 = vld [vmem:[%s874] sm:$0xff]
        %v876 = vld [vmem:[%s874 + $0x10] sm:$0xff]
        %v877 = vld [vmem:[%s874 + $0x20] sm:$0xff]
        %v878 = vld [vmem:[%s874 + $0x30] sm:$0xff]
        %v879 = vld [vmem:[%s874 + $0x40] sm:$0xff]
        %v880 = vld [vmem:[%s874 + $0x50] sm:$0xff]
        %v881 = vld [vmem:[%s874 + $0x60] sm:$0xff]
        %v882 = vld [vmem:[%s874 + $0x70] sm:$0xff]
        %v883 = vpack.c.bf16 %v876, %v875
        %v884 = vpack.c.bf16 %v878, %v877
        %v885 = vpack.c.bf16 %v880, %v879
        %v886 = vpack.c.bf16 %v882, %v881
        %v888 = vsel %vm561, %v883, 0
        %v891 = vsel %vm561, %v884, 0
        %v894 = vsel %vm561, %v885, 0
        %v897 = vsel %vm561, %v886, 0
        %899 = vmatprep.subr.bf16.mxu0 0
        %900 = vmatpush1.bf16.msra.mxu0 %v576
        %901 = vmatprep.subr.bf16.mxu0 0
        %902 = vmatpush1.bf16.msra.mxu0 0
        %903 = vmatprep.subr.bf16.mxu0 0
        %904 = vmatpush1.bf16.msra.mxu0 0
        %905 = vmatprep.subr.bf16.mxu0 0
        %906 = vmatpush1.bf16.msra.mxu0 0
        %907 = vmatprep.subr.bf16.mxu0 0
        %908 = vmatpush1.bf16.msra.mxu0 0
        %909 = vmatprep.subr.bf16.mxu0 0
        %910 = vmatpush1.bf16.msra.mxu0 0
        %911 = vmatprep.subr.bf16.mxu0 0
        %912 = vmatpush1.bf16.msra.mxu0 0
        %913 = vmatprep.subr.bf16.mxu0 0
        %914 = vmatpush1.bf16.msra.mxu0 0
        %915 = vmatprep.subr.bf16.mxu0 0
        %916 = vmatpush1.bf16.msra.mxu0 0
        %917 = vmatprep.subr.bf16.mxu0 0
        %918 = vmatpush1.bf16.msra.mxu0 0
        %919 = vmatprep.subr.bf16.mxu0 0
        %920 = vmatpush1.bf16.msra.mxu0 0
        %921 = vmatprep.subr.bf16.mxu0 0
        %922 = vmatpush1.bf16.msra.mxu0 0
        %923 = vmatprep.subr.bf16.mxu0 0
        %924 = vmatpush1.bf16.msra.mxu0 0
        %925 = vmatprep.subr.bf16.mxu0 0
        %926 = vmatpush1.bf16.msra.mxu0 0
        %927 = vmatprep.subr.bf16.mxu0 0
        %928 = vmatpush1.bf16.msra.mxu0 0
        %929 = vmatprep.subr.bf16.mxu0 0
        %930 = vmatpush1.bf16.msra.mxu0 0
        %931 = vmatprep.mubr.bf16.mxu0 0
        %932 = vmatmul.mubr.bf16.gmra.mrb[0].mxu0 %v888
        %v933 = vpop.f32.mrb[0].mxu0
        %v934 = vadd.f32 %v559, %v933
        %v935 = vpop.f32.mrb[0].mxu0
        %v936 = vpop.f32.mrb[0].mxu0
        %v937 = vadd.f32 %v559, %v936
        %v938 = vpop.f32.mrb[0].mxu0
        %939 = vmatprep.mubr.bf16.mxu0 0
        %940 = vmatmul.mubr.bf16.gmra.mrb[0].mxu0 %v891
        %v941 = vpop.f32.mrb[0].mxu0
        %v942 = vadd.f32 %v559, %v941
        %v943 = vpop.f32.mrb[0].mxu0
        %v944 = vpop.f32.mrb[0].mxu0
        %v945 = vadd.f32 %v559, %v944
        %v946 = vpop.f32.mrb[0].mxu0
        %947 = vmatprep.mubr.bf16.mxu0 0
        %948 = vmatmul.mubr.bf16.gmra.mrb[0].mxu0 %v894
        %v949 = vpop.f32.mrb[0].mxu0
        %v950 = vadd.f32 %v559, %v949
        %v951 = vpop.f32.mrb[0].mxu0
        %v952 = vpop.f32.mrb[0].mxu0
        %v953 = vadd.f32 %v559, %v952
        %v954 = vpop.f32.mrb[0].mxu0
        %955 = vmatprep.mubr.bf16.mxu0 0
        %956 = vmatmul.mubr.bf16.gmra.mrb[0].mxu0 %v897
        %v957 = vpop.f32.mrb[0].mxu0
        %v958 = vadd.f32 %v559, %v957
        %v959 = vpop.f32.mrb[0].mxu0
        %v960 = vpop.f32.mrb[0].mxu0
        %v961 = vadd.f32 %v559, %v960
        %v962 = vpop.f32.mrb[0].mxu0
        %963 = vdwg.mxu0
        %v964 = vmax.f32 %v934, 0.0
        %v965 = vmax.f32 %v937, 0.0
        %v966 = vmax.f32 %v942, 0.0
        %v967 = vmax.f32 %v945, 0.0
        %v968 = vmax.f32 %v950, 0.0
        %v969 = vmax.f32 %v953, 0.0
        %v970 = vmax.f32 %v958, 0.0
        %v971 = vmax.f32 %v961, 0.0
        %s972 = scalar_lea.vmem [#allocation2], 432
        %973 = vst.msk [vmem:[%s972] sm:$0xff] %vm466, %v964
        %974 = vst.msk [vmem:[%s972 + $0x10] sm:$0xff] %vm466, %v965
        %975 = vst.msk [vmem:[%s972 + $0x20] sm:$0xff] %vm466, %v966
        %976 = vst.msk [vmem:[%s972 + $0x30] sm:$0xff] %vm466, %v967
        %977 = vst.msk [vmem:[%s972 + $0x40] sm:$0xff] %vm466, %v968
        %978 = vst.msk [vmem:[%s972 + $0x50] sm:$0xff] %vm466, %v969
        %979 = vst.msk [vmem:[%s972 + $0x60] sm:$0xff] %vm466, %v970
        %980 = vst.msk [vmem:[%s972 + $0x70] sm:$0xff] %vm466, %v971
      $region68: #{shuffle_v2_block_s2.1} parent=63 // pred_fallthru
        _
      %s981 = smul.u32 %s29, 4
      %v982 = vld [vmem:[%s3] sm:$0x1]
      %v983 = vld [vmem:[%s3 + $0x1] sm:$0x1]
      %v984 = vld [vmem:[%s3 + $0x2] sm:$0x1]
      %v985 = vld [vmem:[%s3 + $0x3] sm:$0x1]
      %v986 = vld [vmem:[%s3 + $0x4] sm:$0x1]
      %v987 = vld [vmem:[%s3 + $0x5] sm:$0x1]
      %v988 = vld [vmem:[%s3 + $0x6] sm:$0x1]
      %v989 = vld [vmem:[%s3 + $0x7] sm:$0x1]
      %v990 = vld [vmem:[%s3 + $0x8] sm:$0x1]
      %v991 = vld [vmem:[%s7] sm:$0x1]
      %v992 = vld [vmem:[%s7 + $0x1] sm:$0x1]
      %v993 = vld [vmem:[%s7 + $0x2] sm:$0x1]
      %v994 = vld [vmem:[%s7 + $0x3] sm:$0x1]
      %v995 = vld [vmem:[%s7 + $0x4] sm:$0x1]
      %v996 = vld [vmem:[%s7 + $0x5] sm:$0x1]
      %v997 = vld [vmem:[%s7 + $0x6] sm:$0x1]
      %v998 = vld [vmem:[%s7 + $0x7] sm:$0x1]
      %v999 = vld [vmem:[%s7 + $0x8] sm:$0x1]
      %s1000 = smul.u32 %s981, 16
      %s1001 = scalar_lea.vmem [#allocation2], %s1000
      %v1002 = vld [vmem:[%s1001] sm:$0xff]
      %v1003 = vld [vmem:[%s1001 + $0x10] sm:$0xff]
      %v1004 = vld [vmem:[%s1001 + $0x20] sm:$0xff]
      %v1005 = vld [vmem:[%s1001 + $0x30] sm:$0xff]
      %v1007 = vlaneseq
      %v1008 = vshrl.u32 %v1007, 7
      %v1009 = vsub.s32 0, %v1008
      %v1010 = vrot.slane %v982, %v1009
      %v1012 = vmul.f32 %v1002, %v1010
      %v1013 = vmul.f32 %v1003, %v1010
      %v1014 = vmul.f32 %v1004, %v1010
      %v1015 = vmul.f32 %v1005, %v1010
      %v1016 = vadd.f32 %v1012, 0.0
      %v1017 = vadd.f32 %v1013, 0.0
      %v1018 = vadd.f32 %v1014, 0.0
      %v1019 = vadd.f32 %v1015, 0.0
      %s1020 = scalar_lea.vmem %s440, %s1000
      %v1021 = vld [vmem:[%s1020] sm:$0xff]
      %v1022 = vld [vmem:[%s1020 + $0x10] sm:$0xff]
      %v1023 = vld [vmem:[%s1020 + $0x20] sm:$0xff]
      %v1024 = vld [vmem:[%s1020 + $0x30] sm:$0xff]
      %v1026 = vlaneseq
      %v1027 = vshrl.u32 %v1026, 7
      %v1028 = vsub.s32 0, %v1027
      %v1029 = vrot.slane %v991, %v1028
      %v1031 = vmul.f32 %v1021, %v1029
      %v1032 = vmul.f32 %v1022, %v1029
      %v1033 = vmul.f32 %v1023, %v1029
      %v1034 = vmul.f32 %v1024, %v1029
      %v1035 = vadd.f32 %v1031, 0.0
      %v1036 = vadd.f32 %v1032, 0.0
      %v1037 = vadd.f32 %v1033, 0.0
      %v1038 = vadd.f32 %v1034, 0.0
      %s1039 = sadd.s32 %s1000, 144
      %s1040 = scalar_lea.vmem [#allocation2], %s1039
      %v1041 = vld [vmem:[%s1040] sm:$0xff]
      %v1042 = vld [vmem:[%s1040 + $0x10] sm:$0xff]
      %v1043 = vld [vmem:[%s1040 + $0x20] sm:$0xff]
      %v1044 = vld [vmem:[%s1040 + $0x30] sm:$0xff]
      %v1046 = vlaneseq
      %v1047 = vshrl.u32 %v1046, 7
      %v1048 = vsub.s32 0, %v1047
      %v1049 = vrot.slane %v983, %v1048
      %v1051 = vmul.f32 %v1041, %v1049
      %v1052 = vmul.f32 %v1042, %v1049
      %v1053 = vmul.f32 %v1043, %v1049
      %v1054 = vmul.f32 %v1044, %v1049
      %v1055 = vadd.f32 %v1016, %v1051
      %v1056 = vadd.f32 %v1017, %v1052
      %v1057 = vadd.f32 %v1018, %v1053
      %v1058 = vadd.f32 %v1019, %v1054
      %s1059 = scalar_lea.vmem %s440, %s1039
      %v1060 = vld [vmem:[%s1059] sm:$0xff]
      %v1061 = vld [vmem:[%s1059 + $0x10] sm:$0xff]
      %v1062 = vld [vmem:[%s1059 + $0x20] sm:$0xff]
      %v1063 = vld [vmem:[%s1059 + $0x30] sm:$0xff]
      %v1065 = vlaneseq
      %v1066 = vshrl.u32 %v1065, 7
      %v1067 = vsub.s32 0, %v1066
      %v1068 = vrot.slane %v992, %v1067
      %v1070 = vmul.f32 %v1060, %v1068
      %v1071 = vmul.f32 %v1061, %v1068
      %v1072 = vmul.f32 %v1062, %v1068
      %v1073 = vmul.f32 %v1063, %v1068
      %v1074 = vadd.f32 %v1035, %v1070
      %v1075 = vadd.f32 %v1036, %v1071
      %v1076 = vadd.f32 %v1037, %v1072
      %v1077 = vadd.f32 %v1038, %v1073
      %v1078 = vld [vmem:[%s1001 + $0x1] sm:$0xff]
      %v1079 = vld [vmem:[%s1001 + $0x11] sm:$0xff]
      %v1080 = vld [vmem:[%s1001 + $0x21] sm:$0xff]
      %v1081 = vld [vmem:[%s1001 + $0x31] sm:$0xff]
      %v1083 = vlaneseq
      %v1084 = vshrl.u32 %v1083, 7
      %v1085 = vsub.s32 0, %v1084
      %v1086 = vrot.slane %v984, %v1085
      %v1088 = vmul.f32 %v1078, %v1086
      %v1089 = vmul.f32 %v1079, %v1086
      %v1090 = vmul.f32 %v1080, %v1086
      %v1091 = vmul.f32 %v1081, %v1086
      %v1092 = vadd.f32 %v1055, %v1088
      %v1093 = vadd.f32 %v1056, %v1089
      %v1094 = vadd.f32 %v1057, %v1090
      %v1095 = vadd.f32 %v1058, %v1091
      %v1096 = vld [vmem:[%s1020 + $0x1] sm:$0xff]
      %v1097 = vld [vmem:[%s1020 + $0x11] sm:$0xff]
      %v1098 = vld [vmem:[%s1020 + $0x21] sm:$0xff]
      %v1099 = vld [vmem:[%s1020 + $0x31] sm:$0xff]
      %v1101 = vlaneseq
      %v1102 = vshrl.u32 %v1101, 7
      %v1103 = vsub.s32 0, %v1102
      %v1104 = vrot.slane %v993, %v1103
      %v1106 = vmul.f32 %v1096, %v1104
      %v1107 = vmul.f32 %v1097, %v1104
      %v1108 = vmul.f32 %v1098, %v1104
      %v1109 = vmul.f32 %v1099, %v1104
      %v1110 = vadd.f32 %v1074, %v1106
      %v1111 = vadd.f32 %v1075, %v1107
      %v1112 = vadd.f32 %v1076, %v1108
      %v1113 = vadd.f32 %v1077, %v1109
      %s1114 = sadd.s32 %s1000, 288
      %s1115 = scalar_lea.vmem [#allocation2], %s1114
      %v1116 = vld [vmem:[%s1115] sm:$0xff]
      %v1117 = vld [vmem:[%s1115 + $0x10] sm:$0xff]
      %v1118 = vld [vmem:[%s1115 + $0x20] sm:$0xff]
      %v1119 = vld [vmem:[%s1115 + $0x30] sm:$0xff]
      %v1121 = vlaneseq
      %v1122 = vshrl.u32 %v1121, 7
      %v1123 = vsub.s32 0, %v1122
      %v1124 = vrot.slane %v985, %v1123
      %v1126 = vmul.f32 %v1116, %v1124
      %v1127 = vmul.f32 %v1117, %v1124
      %v1128 = vmul.f32 %v1118, %v1124
      %v1129 = vmul.f32 %v1119, %v1124
      %v1130 = vadd.f32 %v1092, %v1126
      %v1131 = vadd.f32 %v1093, %v1127
      %v1132 = vadd.f32 %v1094, %v1128
      %v1133 = vadd.f32 %v1095, %v1129
      %s1134 = scalar_lea.vmem %s440, %s1114
      %v1135 = vld [vmem:[%s1134] sm:$0xff]
      %v1136 = vld [vmem:[%s1134 + $0x10] sm:$0xff]
      %v1137 = vld [vmem:[%s1134 + $0x20] sm:$0xff]
      %v1138 = vld [vmem:[%s1134 + $0x30] sm:$0xff]
      %v1140 = vlaneseq
      %v1141 = vshrl.u32 %v1140, 7
      %v1142 = vsub.s32 0, %v1141
      %v1143 = vrot.slane %v994, %v1142
      %v1145 = vmul.f32 %v1135, %v1143
      %v1146 = vmul.f32 %v1136, %v1143
      %v1147 = vmul.f32 %v1137, %v1143
      %v1148 = vmul.f32 %v1138, %v1143
      %v1149 = vadd.f32 %v1110, %v1145
      %v1150 = vadd.f32 %v1111, %v1146
      %v1151 = vadd.f32 %v1112, %v1147
      %v1152 = vadd.f32 %v1113, %v1148
      %s1153 = sadd.s32 %s1000, 432
      %s1154 = scalar_lea.vmem [#allocation2], %s1153
      %v1155 = vld [vmem:[%s1154] sm:$0xff]
      %v1156 = vld [vmem:[%s1154 + $0x10] sm:$0xff]
      %v1157 = vld [vmem:[%s1154 + $0x20] sm:$0xff]
      %v1158 = vld [vmem:[%s1154 + $0x30] sm:$0xff]
      %v1160 = vlaneseq
      %v1161 = vshrl.u32 %v1160, 7
      %v1162 = vsub.s32 0, %v1161
      %v1163 = vrot.slane %v986, %v1162
      %v1165 = vmul.f32 %v1155, %v1163
      %v1166 = vmul.f32 %v1156, %v1163
      %v1167 = vmul.f32 %v1157, %v1163
      %v1168 = vmul.f32 %v1158, %v1163
      %v1169 = vadd.f32 %v1130, %v1165
      %v1170 = vadd.f32 %v1131, %v1166
      %v1171 = vadd.f32 %v1132, %v1167
      %v1172 = vadd.f32 %v1133, %v1168
      %s1173 = scalar_lea.vmem %s440, %s1153
      %v1174 = vld [vmem:[%s1173] sm:$0xff]
      %v1175 = vld [vmem:[%s1173 + $0x10] sm:$0xff]
      %v1176 = vld [vmem:[%s1173 + $0x20] sm:$0xff]
      %v1177 = vld [vmem:[%s1173 + $0x30] sm:$0xff]
      %v1179 = vlaneseq
      %v1180 = vshrl.u32 %v1179, 7
      %v1181 = vsub.s32 0, %v1180
      %v1182 = vrot.slane %v995, %v1181
      %v1184 = vmul.f32 %v1174, %v1182
      %v1185 = vmul.f32 %v1175, %v1182
      %v1186 = vmul.f32 %v1176, %v1182
      %v1187 = vmul.f32 %v1177, %v1182
      %v1188 = vadd.f32 %v1149, %v1184
      %v1189 = vadd.f32 %v1150, %v1185
      %v1190 = vadd.f32 %v1151, %v1186
      %v1191 = vadd.f32 %v1152, %v1187
      %v1192 = vld [vmem:[%s1115 + $0x1] sm:$0xff]
      %v1193 = vld [vmem:[%s1115 + $0x11] sm:$0xff]
      %v1194 = vld [vmem:[%s1115 + $0x21] sm:$0xff]
      %v1195 = vld [vmem:[%s1115 + $0x31] sm:$0xff]
      %v1197 = vlaneseq
      %v1198 = vshrl.u32 %v1197, 7
      %v1199 = vsub.s32 0, %v1198
      %v1200 = vrot.slane %v987, %v1199
      %v1202 = vmul.f32 %v1192, %v1200
      %v1203 = vmul.f32 %v1193, %v1200
      %v1204 = vmul.f32 %v1194, %v1200
      %v1205 = vmul.f32 %v1195, %v1200
      %v1206 = vadd.f32 %v1169, %v1202
      %v1207 = vadd.f32 %v1170, %v1203
      %v1208 = vadd.f32 %v1171, %v1204
      %v1209 = vadd.f32 %v1172, %v1205
      %v1210 = vld [vmem:[%s1134 + $0x1] sm:$0xff]
      %v1211 = vld [vmem:[%s1134 + $0x11] sm:$0xff]
      %v1212 = vld [vmem:[%s1134 + $0x21] sm:$0xff]
      %v1213 = vld [vmem:[%s1134 + $0x31] sm:$0xff]
      %v1215 = vlaneseq
      %v1216 = vshrl.u32 %v1215, 7
      %v1217 = vsub.s32 0, %v1216
      %v1218 = vrot.slane %v996, %v1217
      %v1220 = vmul.f32 %v1210, %v1218
      %v1221 = vmul.f32 %v1211, %v1218
      %v1222 = vmul.f32 %v1212, %v1218
      %v1223 = vmul.f32 %v1213, %v1218
      %v1224 = vadd.f32 %v1188, %v1220
      %v1225 = vadd.f32 %v1189, %v1221
      %v1226 = vadd.f32 %v1190, %v1222
      %v1227 = vadd.f32 %v1191, %v1223
      %s1228 = sadd.s32 %s981, 1
      %s1229 = smul.u32 %s1228, 16
      %s1230 = scalar_lea.vmem [#allocation2], %s1229
      %v1231 = vld [vmem:[%s1230] sm:$0xff]
      %v1232 = vld [vmem:[%s1230 + $0x10] sm:$0xff]
      %v1233 = vld [vmem:[%s1230 + $0x20] sm:$0xff]
      %v1234 = vld [vmem:[%s1230 + $0x30] sm:$0xff]
      %v1236 = vlaneseq
      %v1237 = vshrl.u32 %v1236, 7
      %v1238 = vsub.s32 0, %v1237
      %v1239 = vrot.slane %v988, %v1238
      %v1241 = vmul.f32 %v1231, %v1239
      %v1242 = vmul.f32 %v1232, %v1239
      %v1243 = vmul.f32 %v1233, %v1239
      %v1244 = vmul.f32 %v1234, %v1239
      %v1245 = vadd.f32 %v1206, %v1241
      %v1246 = vadd.f32 %v1207, %v1242
      %v1247 = vadd.f32 %v1208, %v1243
      %v1248 = vadd.f32 %v1209, %v1244
      %s1249 = scalar_lea.vmem %s440, %s1229
      %v1250 = vld [vmem:[%s1249] sm:$0xff]
      %v1251 = vld [vmem:[%s1249 + $0x10] sm:$0xff]
      %v1252 = vld [vmem:[%s1249 + $0x20] sm:$0xff]
      %v1253 = vld [vmem:[%s1249 + $0x30] sm:$0xff]
      %v1255 = vlaneseq
      %v1256 = vshrl.u32 %v1255, 7
      %v1257 = vsub.s32 0, %v1256
      %v1258 = vrot.slane %v997, %v1257
      %v1260 = vmul.f32 %v1250, %v1258
      %v1261 = vmul.f32 %v1251, %v1258
      %v1262 = vmul.f32 %v1252, %v1258
      %v1263 = vmul.f32 %v1253, %v1258
      %v1264 = vadd.f32 %v1224, %v1260
      %v1265 = vadd.f32 %v1225, %v1261
      %v1266 = vadd.f32 %v1226, %v1262
      %v1267 = vadd.f32 %v1227, %v1263
      %s1268 = sadd.s32 %s1229, 144
      %s1269 = scalar_lea.vmem [#allocation2], %s1268
      %v1270 = vld [vmem:[%s1269] sm:$0xff]
      %v1271 = vld [vmem:[%s1269 + $0x10] sm:$0xff]
      %v1272 = vld [vmem:[%s1269 + $0x20] sm:$0xff]
      %v1273 = vld [vmem:[%s1269 + $0x30] sm:$0xff]
      %v1275 = vlaneseq
      %v1276 = vshrl.u32 %v1275, 7
      %v1277 = vsub.s32 0, %v1276
      %v1278 = vrot.slane %v989, %v1277
      %v1280 = vmul.f32 %v1270, %v1278
      %v1281 = vmul.f32 %v1271, %v1278
      %v1282 = vmul.f32 %v1272, %v1278
      %v1283 = vmul.f32 %v1273, %v1278
      %v1284 = vadd.f32 %v1245, %v1280
      %v1285 = vadd.f32 %v1246, %v1281
      %v1286 = vadd.f32 %v1247, %v1282
      %v1287 = vadd.f32 %v1248, %v1283
      %s1288 = scalar_lea.vmem %s440, %s1268
      %v1289 = vld [vmem:[%s1288] sm:$0xff]
      %v1290 = vld [vmem:[%s1288 + $0x10] sm:$0xff]
      %v1291 = vld [vmem:[%s1288 + $0x20] sm:$0xff]
      %v1292 = vld [vmem:[%s1288 + $0x30] sm:$0xff]
      %v1294 = vlaneseq
      %v1295 = vshrl.u32 %v1294, 7
      %v1296 = vsub.s32 0, %v1295
      %v1297 = vrot.slane %v998, %v1296
      %v1299 = vmul.f32 %v1289, %v1297
      %v1300 = vmul.f32 %v1290, %v1297
      %v1301 = vmul.f32 %v1291, %v1297
      %v1302 = vmul.f32 %v1292, %v1297
      %v1303 = vadd.f32 %v1264, %v1299
      %v1304 = vadd.f32 %v1265, %v1300
      %v1305 = vadd.f32 %v1266, %v1301
      %v1306 = vadd.f32 %v1267, %v1302
      %v1307 = vld [vmem:[%s1230 + $0x1] sm:$0xff]
      %v1308 = vld [vmem:[%s1230 + $0x11] sm:$0xff]
      %v1309 = vld [vmem:[%s1230 + $0x21] sm:$0xff]
      %v1310 = vld [vmem:[%s1230 + $0x31] sm:$0xff]
      %v1312 = vlaneseq
      %v1313 = vshrl.u32 %v1312, 7
      %v1314 = vsub.s32 0, %v1313
      %v1315 = vrot.slane %v990, %v1314
      %v1317 = vmul.f32 %v1307, %v1315
      %v1318 = vmul.f32 %v1308, %v1315
      %v1319 = vmul.f32 %v1309, %v1315
      %v1320 = vmul.f32 %v1310, %v1315
      %v1321 = vadd.f32 %v1284, %v1317
      %v1322 = vadd.f32 %v1285, %v1318
      %v1323 = vadd.f32 %v1286, %v1319
      %v1324 = vadd.f32 %v1287, %v1320
      %v1325 = vld [vmem:[%s1249 + $0x1] sm:$0xff]
      %v1326 = vld [vmem:[%s1249 + $0x11] sm:$0xff]
      %v1327 = vld [vmem:[%s1249 + $0x21] sm:$0xff]
      %v1328 = vld [vmem:[%s1249 + $0x31] sm:$0xff]
      %v1330 = vlaneseq
      %v1331 = vshrl.u32 %v1330, 7
      %v1332 = vsub.s32 0, %v1331
      %v1333 = vrot.slane %v999, %v1332
      %v1335 = vmul.f32 %v1325, %v1333
      %v1336 = vmul.f32 %v1326, %v1333
      %v1337 = vmul.f32 %v1327, %v1333
      %v1338 = vmul.f32 %v1328, %v1333
      %v1339 = vadd.f32 %v1303, %v1335
      %v1340 = vadd.f32 %v1304, %v1336
      %v1341 = vadd.f32 %v1305, %v1337
      %v1342 = vadd.f32 %v1306, %v1338
      %v1343 = vld [vmem:[%s4] sm:$0x1]
      %v1345 = vlaneseq
      %v1346 = vshrl.u32 %v1345, 7
      %v1347 = vsub.s32 0, %v1346
      %v1348 = vrot.slane %v1343, %v1347
      %v1350 = vadd.f32 %v1321, %v1348
      %v1351 = vadd.f32 %v1322, %v1348
      %v1352 = vadd.f32 %v1323, %v1348
      %v1353 = vadd.f32 %v1324, %v1348
      %v1354 = vld [vmem:[%s8] sm:$0x1]
      %v1356 = vlaneseq
      %v1357 = vshrl.u32 %v1356, 7
      %v1358 = vsub.s32 0, %v1357
      %v1359 = vrot.slane %v1354, %v1358
      %v1361 = vadd.f32 %v1339, %v1359
      %v1362 = vadd.f32 %v1340, %v1359
      %v1363 = vadd.f32 %v1341, %v1359
      %v1364 = vadd.f32 %v1342, %v1359
      %v1365 = vpack.c.bf16 %v1351, %v1350
      %v1366 = vpack.c.bf16 %v1353, %v1352
      %v1367 = vld [vmem:[%s5] sm:$0xf]
      %v1368 = vld [vmem:[%s6] sm:$0x1]
      %v1370 = vlaneseq
      %v1371 = vshrl.u32 %v1370, 7
      %v1372 = vsub.s32 0, %v1371
      %v1373 = vrot.slane %v1368, %v1372
      %vm1375 = vcmask 64512
      %v1377 = vsel %vm1375, %v1365, 0
      %v1380 = vsel %vm1375, %v1366, 0
      %vm1382 = vcmask 1043456
      %v1384 = vsel %vm1382, %v1367, 0
      %1386 = vmatprep.subr.bf16.mxu0 0
      %1387 = vmatpush1.bf16.msra.mxu0 %v1384
      %1388 = vmatprep.subr.bf16.mxu0 0
      %1389 = vmatpush1.bf16.msra.mxu0 0
      %1390 = vmatprep.subr.bf16.mxu0 0
      %1391 = vmatpush1.bf16.msra.mxu0 0
      %1392 = vmatprep.subr.bf16.mxu0 0
      %1393 = vmatpush1.bf16.msra.mxu0 0
      %1394 = vmatprep.subr.bf16.mxu0 0
      %1395 = vmatpush1.bf16.msra.mxu0 0
      %1396 = vmatprep.subr.bf16.mxu0 0
      %1397 = vmatpush1.bf16.msra.mxu0 0
      %1398 = vmatprep.subr.bf16.mxu0 0
      %1399 = vmatpush1.bf16.msra.mxu0 0
      %1400 = vmatprep.subr.bf16.mxu0 0
      %1401 = vmatpush1.bf16.msra.mxu0 0
      %1402 = vmatprep.subr.bf16.mxu0 0
      %1403 = vmatpush1.bf16.msra.mxu0 0
      %1404 = vmatprep.subr.bf16.mxu0 0
      %1405 = vmatpush1.bf16.msra.mxu0 0
      %1406 = vmatprep.subr.bf16.mxu0 0
      %1407 = vmatpush1.bf16.msra.mxu0 0
      %1408 = vmatprep.subr.bf16.mxu0 0
      %1409 = vmatpush1.bf16.msra.mxu0 0
      %1410 = vmatprep.subr.bf16.mxu0 0
      %1411 = vmatpush1.bf16.msra.mxu0 0
      %1412 = vmatprep.subr.bf16.mxu0 0
      %1413 = vmatpush1.bf16.msra.mxu0 0
      %1414 = vmatprep.subr.bf16.mxu0 0
      %1415 = vmatpush1.bf16.msra.mxu0 0
      %1416 = vmatprep.subr.bf16.mxu0 0
      %1417 = vmatpush1.bf16.msra.mxu0 0
      %1418 = vmatprep.mubr.bf16.mxu0 0
      %1419 = vmatmul.mubr.bf16.gmra.mrb[0].mxu0 %v1377
      %v1420 = vpop.f32.mrb[0].mxu0
      %v1421 = vadd.f32 %v1373, %v1420
      %v1422 = vpop.f32.mrb[0].mxu0
      %v1423 = vpop.f32.mrb[0].mxu0
      %v1424 = vadd.f32 %v1373, %v1423
      %v1425 = vpop.f32.mrb[0].mxu0
      %1426 = vmatprep.mubr.bf16.mxu0 0
      %1427 = vmatmul.mubr.bf16.gmra.mrb[0].mxu0 %v1380
      %v1428 = vpop.f32.mrb[0].mxu0
      %v1429 = vadd.f32 %v1373, %v1428
      %v1430 = vpop.f32.mrb[0].mxu0
      %v1431 = vpop.f32.mrb[0].mxu0
      %v1432 = vadd.f32 %v1373, %v1431
      %v1433 = vpop.f32.mrb[0].mxu0
      %1434 = vdwg.mxu0
      %v1435 = vmax.f32 %v1421, 0.0
      %v1436 = vmax.f32 %v1424, 0.0
      %v1437 = vmax.f32 %v1429, 0.0
      %v1438 = vmax.f32 %v1432, 0.0
      %v1439 = vpack.c.bf16 %v1362, %v1361
      %v1440 = vpack.c.bf16 %v1364, %v1363
      %v1441 = vld [vmem:[%s9] sm:$0x3]
      %v1442 = vld [vmem:[%s10] sm:$0x1]
      %v1444 = vlaneseq
      %v1445 = vshrl.u32 %v1444, 7
      %v1446 = vsub.s32 0, %v1445
      %v1447 = vrot.slane %v1442, %v1446
      %vm1449 = vcmask 31744
      %v1451 = vsel %vm1449, %v1439, 0
      %v1454 = vsel %vm1449, %v1440, 0
      %vm1456 = vcmask 1041408
      %v1458 = vsel %vm1456, %v1441, 0
      %1460 = vmatprep.subr.bf16.mxu0 0
      %1461 = vmatpush1.bf16.msra.mxu0 %v1458
      %1462 = vmatprep.subr.bf16.mxu0 0
      %1463 = vmatpush1.bf16.msra.mxu0 0
      %1464 = vmatprep.subr.bf16.mxu0 0
      %1465 = vmatpush1.bf16.msra.mxu0 0
      %1466 = vmatprep.subr.bf16.mxu0 0
      %1467 = vmatpush1.bf16.msra.mxu0 0
      %1468 = vmatprep.subr.bf16.mxu0 0
      %1469 = vmatpush1.bf16.msra.mxu0 0
      %1470 = vmatprep.subr.bf16.mxu0 0
      %1471 = vmatpush1.bf16.msra.mxu0 0
      %1472 = vmatprep.subr.bf16.mxu0 0
      %1473 = vmatpush1.bf16.msra.mxu0 0
      %1474 = vmatprep.subr.bf16.mxu0 0
      %1475 = vmatpush1.bf16.msra.mxu0 0
      %1476 = vmatprep.subr.bf16.mxu0 0
      %1477 = vmatpush1.bf16.msra.mxu0 0
      %1478 = vmatprep.subr.bf16.mxu0 0
      %1479 = vmatpush1.bf16.msra.mxu0 0
      %1480 = vmatprep.subr.bf16.mxu0 0
      %1481 = vmatpush1.bf16.msra.mxu0 0
      %1482 = vmatprep.subr.bf16.mxu0 0
      %1483 = vmatpush1.bf16.msra.mxu0 0
      %1484 = vmatprep.subr.bf16.mxu0 0
      %1485 = vmatpush1.bf16.msra.mxu0 0
      %1486 = vmatprep.subr.bf16.mxu0 0
      %1487 = vmatpush1.bf16.msra.mxu0 0
      %1488 = vmatprep.subr.bf16.mxu0 0
      %1489 = vmatpush1.bf16.msra.mxu0 0
      %1490 = vmatprep.subr.bf16.mxu0 0
      %1491 = vmatpush1.bf16.msra.mxu0 0
      %1492 = vmatprep.mubr.bf16.mxu0 0
      %1493 = vmatmul.mubr.bf16.gmra.mrb[0].mxu0 %v1451
      %v1494 = vpop.f32.mrb[0].mxu0
      %v1495 = vadd.f32 %v1447, %v1494
      %v1496 = vpop.f32.mrb[0].mxu0
      %v1497 = vpop.f32.mrb[0].mxu0
      %v1498 = vadd.f32 %v1447, %v1497
      %v1499 = vpop.f32.mrb[0].mxu0
      %1500 = vmatprep.mubr.bf16.mxu0 0
      %1501 = vmatmul.mubr.bf16.gmra.mrb[0].mxu0 %v1454
      %v1502 = vpop.f32.mrb[0].mxu0
      %v1503 = vadd.f32 %v1447, %v1502
      %v1504 = vpop.f32.mrb[0].mxu0
      %v1505 = vpop.f32.mrb[0].mxu0
      %v1506 = vadd.f32 %v1447, %v1505
      %v1507 = vpop.f32.mrb[0].mxu0
      %1508 = vdwg.mxu0
      %v1509 = vmax.f32 %v1495, 0.0
      %v1510 = vmax.f32 %v1498, 0.0
      %v1511 = vmax.f32 %v1503, 0.0
      %v1512 = vmax.f32 %v1506, 0.0
      %1513 = vst.msk [vmem:[%s459] sm:$0xff] %vm1375, %v1435
      %1514 = vst.msk [vmem:[%s459 + $0x8] sm:$0xff] %vm1375, %v1436
      %1515 = vst.msk [vmem:[%s459 + $0x10] sm:$0xff] %vm1375, %v1437
      %1516 = vst.msk [vmem:[%s459 + $0x18] sm:$0xff] %vm1375, %v1438
      %1517 = vst.msk [vmem:[%s449] sm:$0xff] %vm1449, %v1509
      %1518 = vst.msk [vmem:[%s449 + $0x8] sm:$0xff] %vm1449, %v1510
      %1519 = vst.msk [vmem:[%s449 + $0x10] sm:$0xff] %vm1449, %v1511
      %1520 = vst.msk [vmem:[%s449 + $0x18] sm:$0xff] %vm1449, %v1512
      %s1521 = smul.u32 4, %s29
      %p1522 = scmp.lt.s32.totalorder %s28, 1
      %s1523 = scalar_select %p1522, %s28, 1
      %p1524 = scmp.lt.s32.totalorder %s1521, 7
      %s1525 = scalar_select %p1524, %s1521, 7
      %s1526 = smul.addr %s1523, 8
      %s1527 = sadd.s32 %s1525, %s1526
      %s1528 = smul.addr %s1527, 8
      %s1529 = scalar_lea.vmem %s11, %s1528
      %s1530 = smul.u32 4, %s29
      %p1531 = scmp.lt.s32.totalorder %s28, 1
      %s1532 = scalar_select %p1531, %s28, 1
      %p1533 = scmp.lt.s32.totalorder %s1530, 7
      %s1534 = scalar_select %p1533, %s1530, 7
      %s1535 = smul.addr %s1532, 8
      %s1536 = sadd.s32 %s1534, %s1535
      %s1537 = smul.addr %s1536, 8
      %s1538 = scalar_lea.vmem %s12, %s1537
      // Predicated region
      $region69: #{shuffle_v2_block_s2.1} parent=63 // pred_check
        %p1539 = pneg %p292
      $region70: #{shuffle_v2_block_s2.1} parent=63 // pred_check_branch
        %1541 = sbr.rel (%p1539) target = $region72
      $region71: #{shuffle_v2_block_s2.1} parent=63 // pred_region
        %s1542 = smul.u32 4, %s29
      $region72: #{shuffle_v2_block_s2.1} parent=63 // pred_fallthru
        _
      // Predicated region
      $region73: #{shuffle_v2_block_s2.1} parent=63 // pred_check
        %p1543 = pneg %p320
      $region74: #{shuffle_v2_block_s2.1} parent=63 // pred_check_branch
        %1545 = sbr.rel (%p1543) target = $region76
      $region75: #{shuffle_v2_block_s2.1} parent=63 // pred_region
        %s1546 = smul.u32 4, %s29
      $region76: #{shuffle_v2_block_s2.1} parent=63 // pred_fallthru
        _
    $region64: #{shuffle_v2_block_s2.1} parent=5 // pred_fallthru
      _
    %p1547 = scmp.le.s32.totalorder 2, %s19
    // Predicated region
    $region77: #{shuffle_v2_block_s2.1} parent=5 // pred_check
      %p1548 = pneg %p1547
    $region78: #{shuffle_v2_block_s2.1} parent=5 // pred_check_branch
      %1550 = sbr.rel (%p1548) target = $region80
    $region79: #{shuffle_v2_block_s2.1} parent=5 // pred_region
      %s1551 = ssub.s32 %s19, 2
      // Predicated region
      $region81: #{shuffle_v2_block_s2.1} parent=79 // pred_check
        %p1552 = pneg %p298
      $region82: #{shuffle_v2_block_s2.1} parent=79 // pred_check_branch
        %1554 = sbr.rel (%p1552) target = $region84
      $region83: #{shuffle_v2_block_s2.1} parent=79 // pred_region
        %s1555 = smul.u32 4, %s31
        %p1556 = scmp.lt.s32.totalorder %s30, 1
        %s1557 = scalar_select %p1556, %s30, 1
        %p1558 = scmp.lt.s32.totalorder %s1555, 7
        %s1559 = scalar_select %p1558, %s1555, 7
        %s1560 = smul.addr %s1557, 8
        %s1561 = sadd.s32 %s1559, %s1560
        %s1562 = smul.addr %s1561, 8
        %s1563 = scalar_lea.vmem %s11, %s1562
      $region84: #{shuffle_v2_block_s2.1} parent=79 // pred_fallthru
        _
      // Predicated region
      $region85: #{shuffle_v2_block_s2.1} parent=79 // pred_check
        %p1564 = pneg %p326
      $region86: #{shuffle_v2_block_s2.1} parent=79 // pred_check_branch
        %1566 = sbr.rel (%p1564) target = $region88
      $region87: #{shuffle_v2_block_s2.1} parent=79 // pred_region
        %s1567 = smul.u32 4, %s31
        %p1568 = scmp.lt.s32.totalorder %s30, 1
        %s1569 = scalar_select %p1568, %s30, 1
        %p1570 = scmp.lt.s32.totalorder %s1567, 7
        %s1571 = scalar_select %p1570, %s1567, 7
        %s1572 = smul.addr %s1569, 8
        %s1573 = sadd.s32 %s1571, %s1572
        %s1574 = smul.addr %s1573, 8
        %s1575 = scalar_lea.vmem %s12, %s1574
      $region88: #{shuffle_v2_block_s2.1} parent=79 // pred_fallthru
        _
    $region80: #{shuffle_v2_block_s2.1} parent=5 // pred_fallthru
      _
  $region6: #{shuffle_v2_block_s2.1} parent=0 // loop_footer
    %s23 = sadd.s32 1, %s19
  $region7: #{shuffle_v2_block_s2.1} parent=0 // loop_footer_branch
    %18 = sbr.rel target = $region3
  $region8: #{shuffle_v2_block_s2.1} parent=0 // loop_exit
    _

</llo_original>
